<compile_context>
chip_gen: v7x
topology: tpu7x:2x2x1
jax: 0.10.0
libtpu: 0.0.40
codegen_flags: <defaults>
</compile_context>

<pallas_src>
import functools
import math

import jax
import jax.numpy as jnp
from jax.experimental import pallas as pl
from jax.experimental.pallas import tpu as pltpu


# ----------------------------------------------------------------------------
# Fused Patchify + nn.Linear(patch_dim, D) + (bias + PositionalEncoding)
# ----------------------------------------------------------------------------
def _patch_embed_kernel(x_ref, w_ref, pb_ref, o_ref, lhs_ref, *, p, n_h, n_w, C):
    # x_ref:   (C*n_h*p, n_w, p)  one batch's image; row index = (c*n_h+ph)*p + r
    # w_ref:   (C*p*p, D)         embedding weight (VMEM resident, fetched once)
    # pb_ref:  (L, D)             pos_enc[1:] + bias (precomputed, resident)
    # o_ref:   (L, D)             patch tokens for this batch
    # lhs_ref: (L, C*p*p) scratch unfolded patches (nn.Unfold column order)
    pp = p * p
    # Static unrolled unfold: C*p*n_h small VMEM stores (all offsets static).
    for c in range(C):
        for ph in range(n_h):
            for r in range(p):
                src_row = (c * n_h + ph) * p + r
                lhs_ref[ph * n_w:(ph + 1) * n_w,
                        c * pp + r * p: c * pp + (r + 1) * p] = x_ref[src_row]
    # One large MXU matmul: (L, C*p*p) @ (C*p*p, D), f32 accumulate.
    acc = jnp.dot(lhs_ref[...], w_ref[...], preferred_element_type=jnp.float32)
    o_ref[...] = (acc + pb_ref[...]).astype(o_ref.dtype)


def vit_embed(x, w_emb, b_emb, class_token, pos_enc, patch_size):
    """Fused Patchify -> Linear -> (ClassToken) -> PositionalEncoding.

    Returns the (B, L+1, D) token sequence fed to the transformer layers.
    """
    B, C, H, W = x.shape
    p = patch_size
    assert H % p == 0 and W % p == 0, "spatial dims must be divisible by patch_size"
    n_h, n_w = H // p, W // p
    L = n_h * n_w
    patch_dim, D = w_emb.shape
    assert patch_dim == C * p * p

    # Free reshape (pure adjacent dim split/merge, no data movement):
    # (B, C, H, W) -> (B, C*H, n_w, p); row (c*n_h + ph)*p + r of dim 1 is the
    # image row (c, ph*p + r) already split into (n_w, p) patch columns.
    x4 = x.reshape(B, C * n_h * p, n_w, p)

    # Fold the Linear bias into the patch-token positional rows (one-time op).
    pos_bias = pos_enc[1:].astype(jnp.float32) + b_emb.astype(jnp.float32)[None, :]

    patch_tokens = pl.pallas_call(
        functools.partial(_patch_embed_kernel, p=p, n_h=n_h, n_w=n_w, C=C),
        out_shape=jax.ShapeDtypeStruct((B, L, D), x.dtype),
        grid=(B,),
        in_specs=[
            pl.BlockSpec((None, C * n_h * p, n_w, p), lambda b: (b, 0, 0, 0)),
            pl.BlockSpec((patch_dim, D), lambda b: (0, 0)),   # weight: resident
            pl.BlockSpec((L, D), lambda b: (0, 0)),            # pos+bias: resident
        ],
        out_specs=pl.BlockSpec((None, L, D), lambda b: (b, 0, 0)),
        scratch_shapes=[pltpu.VMEM((L, patch_dim), x.dtype)],
        compiler_params=pltpu.CompilerParams(
            dimension_semantics=("parallel",)),
    )(x4, w_emb, pos_bias)

    # Class-token row (sequence position 0): tiny (B, 1, D) glue in plain JAX.
    cls_row = (class_token.reshape(1, 1, D) + pos_enc[0].reshape(1, 1, D)).astype(x.dtype)
    cls_rows = jnp.broadcast_to(cls_row, (B, 1, D))
    return jnp.concatenate([cls_rows, patch_tokens], axis=1)


# ----------------------------------------------------------------------------
# Pure-JAX references + parameter construction
# ----------------------------------------------------------------------------
def patchify_reference(x, patch_size):
    B, C, H, W = x.shape
    p = patch_size
    n_h, n_w = H // p, W // p
    y = x.reshape(B, C, n_h, p, n_w, p)
    y = jnp.transpose(y, (0, 2, 4, 1, 3, 5))          # (B, n_h, n_w, C, p, p)
    return y.reshape(B, n_h * n_w, C * p * p)


def vit_embed_reference(x, w_emb, b_emb, class_token, pos_enc, patch_size):
    B = x.shape[0]
    D = w_emb.shape[1]
    patches = patchify_reference(x, patch_size)
    tokens = jnp.einsum("blk,kd->bld", patches, w_emb) + b_emb
    cls = jnp.broadcast_to(class_token.reshape(1, 1, D), (B, 1, D))
    seq = jnp.concatenate([cls, tokens], axis=1)
    return seq + pos_enc[None, :, :]


def sinusoidal_positional_encoding(num_positions, dim_embedding):
    """Mirrors the PositionalEncoding module's sin/cos table."""
    position = jnp.arange(num_positions, dtype=jnp.float32)[:, None]
    indices = jnp.arange(0, dim_embedding, 2, dtype=jnp.float32)
    factor = jnp.exp(indices * (-(math.log(10000.0) / dim_embedding)))
    angles = position * factor
    pe = jnp.zeros((num_positions, dim_embedding), dtype=jnp.float32)
    pe = pe.at[:, 0::2].set(jnp.sin(angles))
    if dim_embedding % 2 == 0:
        pe = pe.at[:, 1::2].set(jnp.cos(angles))
    else:
        pe = pe.at[:, 1::2].set(jnp.cos(angles)[:, :-1])
    return pe


if __name__ == "__main__":
    key = jax.random.PRNGKey(0)
    k1, k2, k3, k4 = jax.random.split(key, 4)

    # Shapes implied by the module: grayscale (C=1) 64x64 image (image_size is
    # hard-coded to 64), patch_size=8 -> 64 patches of dim 64; dim_embedding=128
    # (lane-dense output last dim).
    B, C, H, W = 2, 1, 64, 64
    patch_size = 8
    dim_embedding = 128
    n_h, n_w = H // patch_size, W // patch_size
    L = n_h * n_w
    patch_dim = C * patch_size * patch_size

    x = jax.random.normal(k1, (B, C, H, W), dtype=jnp.float32)
    w_emb = 0.02 * jax.random.normal(k2, (patch_dim, dim_embedding), dtype=jnp.float32)
    b_emb = 0.02 * jax.random.normal(k3, (dim_embedding,), dtype=jnp.float32)
    class_token = jax.random.normal(k4, (dim_embedding,), dtype=jnp.float32)
    pos_enc = sinusoidal_positional_encoding(L + 1, dim_embedding)

    # Fused Patchify + Linear + ClassToken + PositionalEncoding embedding.
    tokens = jax.block_until_ready(
        vit_embed(x, w_emb, b_emb, class_token, pos_enc, patch_size))
    tokens_ref = vit_embed_reference(x, w_emb, b_emb, class_token, pos_enc, patch_size)
    assert tokens.shape == (B, L + 1, dim_embedding), tokens.shape
    assert jnp.allclose(tokens, tokens_ref, rtol=5e-3, atol=5e-3), \
        "Pallas fused patch-embed mismatch vs reference"

    print("KERNEL_OK")
</pallas_src>

<mosaic_0001>
module attributes {stable_mosaic.version = 11 : i64} {
  func.func @_patch_embed_kernel(%arg0: i32, %arg1: memref<1x64x8x8xf32, #tpu.memory_space<vmem>>, %arg2: memref<64x128xf32, #tpu.memory_space<vmem>>, %arg3: memref<64x128xf32, #tpu.memory_space<vmem>>, %arg4: memref<1x64x128xf32, #tpu.memory_space<vmem>>, %arg5: memref<64x64xf32, #tpu.memory_space<vmem>>) attributes {dimension_semantics = [#tpu.dimension_semantics<parallel>], iteration_bounds = array<i64: 2>, scalar_prefetch = 0 : i64, scratch_operands = 1 : i64, tpu.core_type = #tpu.core_type<tc>, window_params = [{transform_indices = @transform_0, window_bounds = array<i64: 1, 64, 8, 8>}, {pipeline_mode = #tpu.pipeline_mode<synchronous>, transform_indices = @transform_1, window_bounds = array<i64: 64, 128>}, {pipeline_mode = #tpu.pipeline_mode<synchronous>, transform_indices = @transform_2, window_bounds = array<i64: 64, 128>}, {transform_indices = @transform_3, window_bounds = array<i64: 1, 64, 128>}]} {
    %c0 = arith.constant 0 : index
    %c0_0 = arith.constant 0 : index
    %c0_1 = arith.constant 0 : index
    %c0_2 = arith.constant 0 : index
    %0 = vector.load %arg1[%c0, %c0_0, %c0_1, %c0_2] : memref<1x64x8x8xf32, #tpu.memory_space<vmem>>, vector<1x1x8x8xf32>
    %1 = vector.shape_cast %0 : vector<1x1x8x8xf32> to vector<8x8xf32>
    %c0_3 = arith.constant 0 : index
    %c0_4 = arith.constant 0 : index
    %2 = vector.load %arg5[%c0_3, %c0_4] : memref<64x64xf32, #tpu.memory_space<vmem>>, vector<8x8xf32>
    tpu.vector_store %arg5[%c0_3, %c0_4], %1 {strides = array<i32>} : memref<64x64xf32, #tpu.memory_space<vmem>>, vector<8x8xf32>,
    %c0_5 = arith.constant 0 : index
    %c1 = arith.constant 1 : index
    %c0_6 = arith.constant 0 : index
    %c0_7 = arith.constant 0 : index
    %3 = vector.load %arg1[%c0_5, %c1, %c0_6, %c0_7] : memref<1x64x8x8xf32, #tpu.memory_space<vmem>>, vector<1x1x8x8xf32>
    %4 = vector.shape_cast %3 : vector<1x1x8x8xf32> to vector<8x8xf32>
    %c0_8 = arith.constant 0 : index
    %c8 = arith.constant 8 : index
    %5 = vector.load %arg5[%c0_8, %c8] : memref<64x64xf32, #tpu.memory_space<vmem>>, vector<8x8xf32>
    tpu.vector_store %arg5[%c0_8, %c8], %4 {strides = array<i32>} : memref<64x64xf32, #tpu.memory_space<vmem>>, vector<8x8xf32>,
    %c0_9 = arith.constant 0 : index
    %c2 = arith.constant 2 : index
    %c0_10 = arith.constant 0 : index
    %c0_11 = arith.constant 0 : index
    %6 = vector.load %arg1[%c0_9, %c2, %c0_10, %c0_11] : memref<1x64x8x8xf32, #tpu.memory_space<vmem>>, vector<1x1x8x8xf32>
    %7 = vector.shape_cast %6 : vector<1x1x8x8xf32> to vector<8x8xf32>
    %c0_12 = arith.constant 0 : index
    %c16 = arith.constant 16 : index
    %8 = vector.load %arg5[%c0_12, %c16] : memref<64x64xf32, #tpu.memory_space<vmem>>, vector<8x8xf32>
    tpu.vector_store %arg5[%c0_12, %c16], %7 {strides = array<i32>} : memref<64x64xf32, #tpu.memory_space<vmem>>, vector<8x8xf32>,
    %c0_13 = arith.constant 0 : index
    %c3 = arith.constant 3 : index
    %c0_14 = arith.constant 0 : index
    %c0_15 = arith.constant 0 : index
    %9 = vector.load %arg1[%c0_13, %c3, %c0_14, %c0_15] : memref<1x64x8x8xf32, #tpu.memory_space<vmem>>, vector<1x1x8x8xf32>
    %10 = vector.shape_cast %9 : vector<1x1x8x8xf32> to vector<8x8xf32>
    %c0_16 = arith.constant 0 : index
    %c24 = arith.constant 24 : index
    %11 = vector.load %arg5[%c0_16, %c24] : memref<64x64xf32, #tpu.memory_space<vmem>>, vector<8x8xf32>
    tpu.vector_store %arg5[%c0_16, %c24], %10 {strides = array<i32>} : memref<64x64xf32, #tpu.memory_space<vmem>>, vector<8x8xf32>,
    %c0_17 = arith.constant 0 : index
    %c4 = arith.constant 4 : index
    %c0_18 = arith.constant 0 : index
    %c0_19 = arith.constant 0 : index
    %12 = vector.load %arg1[%c0_17, %c4, %c0_18, %c0_19] : memref<1x64x8x8xf32, #tpu.memory_space<vmem>>, vector<1x1x8x8xf32>
    %13 = vector.shape_cast %12 : vector<1x1x8x8xf32> to vector<8x8xf32>
    %c0_20 = arith.constant 0 : index
    %c32 = arith.constant 32 : index
    %14 = vector.load %arg5[%c0_20, %c32] : memref<64x64xf32, #tpu.memory_space<vmem>>, vector<8x8xf32>
    tpu.vector_store %arg5[%c0_20, %c32], %13 {strides = array<i32>} : memref<64x64xf32, #tpu.memory_space<vmem>>, vector<8x8xf32>,
    %c0_21 = arith.constant 0 : index
    %c5 = arith.constant 5 : index
    %c0_22 = arith.constant 0 : index
    %c0_23 = arith.constant 0 : index
    %15 = vector.load %arg1[%c0_21, %c5, %c0_22, %c0_23] : memref<1x64x8x8xf32, #tpu.memory_space<vmem>>, vector<1x1x8x8xf32>
    %16 = vector.shape_cast %15 : vector<1x1x8x8xf32> to vector<8x8xf32>
    %c0_24 = arith.constant 0 : index
    %c40 = arith.constant 40 : index
    %17 = vector.load %arg5[%c0_24, %c40] : memref<64x64xf32, #tpu.memory_space<vmem>>, vector<8x8xf32>
    tpu.vector_store %arg5[%c0_24, %c40], %16 {strides = array<i32>} : memref<64x64xf32, #tpu.memory_space<vmem>>, vector<8x8xf32>,
    %c0_25 = arith.constant 0 : index
    %c6 = arith.constant 6 : index
    %c0_26 = arith.constant 0 : index
    %c0_27 = arith.constant 0 : index
    %18 = vector.load %arg1[%c0_25, %c6, %c0_26, %c0_27] : memref<1x64x8x8xf32, #tpu.memory_space<vmem>>, vector<1x1x8x8xf32>
    %19 = vector.shape_cast %18 : vector<1x1x8x8xf32> to vector<8x8xf32>
    %c0_28 = arith.constant 0 : index
    %c48 = arith.constant 48 : index
    %20 = vector.load %arg5[%c0_28, %c48] : memref<64x64xf32, #tpu.memory_space<vmem>>, vector<8x8xf32>
    tpu.vector_store %arg5[%c0_28, %c48], %19 {strides = array<i32>} : memref<64x64xf32, #tpu.memory_space<vmem>>, vector<8x8xf32>,
    %c0_29 = arith.constant 0 : index
    %c7 = arith.constant 7 : index
    %c0_30 = arith.constant 0 : index
    %c0_31 = arith.constant 0 : index
    %21 = vector.load %arg1[%c0_29, %c7, %c0_30, %c0_31] : memref<1x64x8x8xf32, #tpu.memory_space<vmem>>, vector<1x1x8x8xf32>
    %22 = vector.shape_cast %21 : vector<1x1x8x8xf32> to vector<8x8xf32>
    %c0_32 = arith.constant 0 : index
    %c56 = arith.constant 56 : index
    %23 = vector.load %arg5[%c0_32, %c56] : memref<64x64xf32, #tpu.memory_space<vmem>>, vector<8x8xf32>
    tpu.vector_store %arg5[%c0_32, %c56], %22 {strides = array<i32>} : memref<64x64xf32, #tpu.memory_space<vmem>>, vector<8x8xf32>,
    %c0_33 = arith.constant 0 : index
    %c8_34 = arith.constant 8 : index
    %c0_35 = arith.constant 0 : index
    %c0_36 = arith.constant 0 : index
    %24 = vector.load %arg1[%c0_33, %c8_34, %c0_35, %c0_36] : memref<1x64x8x8xf32, #tpu.memory_space<vmem>>, vector<1x1x8x8xf32>
    %25 = vector.shape_cast %24 : vector<1x1x8x8xf32> to vector<8x8xf32>
    %c8_37 = arith.constant 8 : index
    %c0_38 = arith.constant 0 : index
    %26 = vector.load %arg5[%c8_37, %c0_38] : memref<64x64xf32, #tpu.memory_space<vmem>>, vector<8x8xf32>
    tpu.vector_store %arg5[%c8_37, %c0_38], %25 {strides = array<i32>} : memref<64x64xf32, #tpu.memory_space<vmem>>, vector<8x8xf32>,
    %c0_39 = arith.constant 0 : index
    %c9 = arith.constant 9 : index
    %c0_40 = arith.constant 0 : index
    %c0_41 = arith.constant 0 : index
    %27 = vector.load %arg1[%c0_39, %c9, %c0_40, %c0_41] : memref<1x64x8x8xf32, #tpu.memory_space<vmem>>, vector<1x1x8x8xf32>
    %28 = vector.shape_cast %27 : vector<1x1x8x8xf32> to vector<8x8xf32>
    %c8_42 = arith.constant 8 : index
    %c8_43 = arith.constant 8 : index
    %29 = vector.load %arg5[%c8_42, %c8_43] : memref<64x64xf32, #tpu.memory_space<vmem>>, vector<8x8xf32>
    tpu.vector_store %arg5[%c8_42, %c8_43], %28 {strides = array<i32>} : memref<64x64xf32, #tpu.memory_space<vmem>>, vector<8x8xf32>,
    %c0_44 = arith.constant 0 : index
    %c10 = arith.constant 10 : index
    %c0_45 = arith.constant 0 : index
    %c0_46 = arith.constant 0 : index
    %30 = vector.load %arg1[%c0_44, %c10, %c0_45, %c0_46] : memref<1x64x8x8xf32, #tpu.memory_space<vmem>>, vector<1x1x8x8xf32>
    %31 = vector.shape_cast %30 : vector<1x1x8x8xf32> to vector<8x8xf32>
    %c8_47 = arith.constant 8 : index
    %c16_48 = arith.constant 16 : index
    %32 = vector.load %arg5[%c8_47, %c16_48] : memref<64x64xf32, #tpu.memory_space<vmem>>, vector<8x8xf32>
    tpu.vector_store %arg5[%c8_47, %c16_48], %31 {strides = array<i32>} : memref<64x64xf32, #tpu.memory_space<vmem>>, vector<8x8xf32>,
    %c0_49 = arith.constant 0 : index
    %c11 = arith.constant 11 : index
    %c0_50 = arith.constant 0 : index
    %c0_51 = arith.constant 0 : index
    %33 = vector.load %arg1[%c0_49, %c11, %c0_50, %c0_51] : memref<1x64x8x8xf32, #tpu.memory_space<vmem>>, vector<1x1x8x8xf32>
    %34 = vector.shape_cast %33 : vector<1x1x8x8xf32> to vector<8x8xf32>
    %c8_52 = arith.constant 8 : index
    %c24_53 = arith.constant 24 : index
    %35 = vector.load %arg5[%c8_52, %c24_53] : memref<64x64xf32, #tpu.memory_space<vmem>>, vector<8x8xf32>
    tpu.vector_store %arg5[%c8_52, %c24_53], %34 {strides = array<i32>} : memref<64x64xf32, #tpu.memory_space<vmem>>, vector<8x8xf32>,
    %c0_54 = arith.constant 0 : index
    %c12 = arith.constant 12 : index
    %c0_55 = arith.constant 0 : index
    %c0_56 = arith.constant 0 : index
    %36 = vector.load %arg1[%c0_54, %c12, %c0_55, %c0_56] : memref<1x64x8x8xf32, #tpu.memory_space<vmem>>, vector<1x1x8x8xf32>
    %37 = vector.shape_cast %36 : vector<1x1x8x8xf32> to vector<8x8xf32>
    %c8_57 = arith.constant 8 : index
    %c32_58 = arith.constant 32 : index
    %38 = vector.load %arg5[%c8_57, %c32_58] : memref<64x64xf32, #tpu.memory_space<vmem>>, vector<8x8xf32>
    tpu.vector_store %arg5[%c8_57, %c32_58], %37 {strides = array<i32>} : memref<64x64xf32, #tpu.memory_space<vmem>>, vector<8x8xf32>,
    %c0_59 = arith.constant 0 : index
    %c13 = arith.constant 13 : index
    %c0_60 = arith.constant 0 : index
    %c0_61 = arith.constant 0 : index
    %39 = vector.load %arg1[%c0_59, %c13, %c0_60, %c0_61] : memref<1x64x8x8xf32, #tpu.memory_space<vmem>>, vector<1x1x8x8xf32>
    %40 = vector.shape_cast %39 : vector<1x1x8x8xf32> to vector<8x8xf32>
    %c8_62 = arith.constant 8 : index
    %c40_63 = arith.constant 40 : index
    %41 = vector.load %arg5[%c8_62, %c40_63] : memref<64x64xf32, #tpu.memory_space<vmem>>, vector<8x8xf32>
    tpu.vector_store %arg5[%c8_62, %c40_63], %40 {strides = array<i32>} : memref<64x64xf32, #tpu.memory_space<vmem>>, vector<8x8xf32>,
    %c0_64 = arith.constant 0 : index
    %c14 = arith.constant 14 : index
    %c0_65 = arith.constant 0 : index
    %c0_66 = arith.constant 0 : index
    %42 = vector.load %arg1[%c0_64, %c14, %c0_65, %c0_66] : memref<1x64x8x8xf32, #tpu.memory_space<vmem>>, vector<1x1x8x8xf32>
    %43 = vector.shape_cast %42 : vector<1x1x8x8xf32> to vector<8x8xf32>
    %c8_67 = arith.constant 8 : index
    %c48_68 = arith.constant 48 : index
    %44 = vector.load %arg5[%c8_67, %c48_68] : memref<64x64xf32, #tpu.memory_space<vmem>>, vector<8x8xf32>
    tpu.vector_store %arg5[%c8_67, %c48_68], %43 {strides = array<i32>} : memref<64x64xf32, #tpu.memory_space<vmem>>, vector<8x8xf32>,
    %c0_69 = arith.constant 0 : index
    %c15 = arith.constant 15 : index
    %c0_70 = arith.constant 0 : index
    %c0_71 = arith.constant 0 : index
    %45 = vector.load %arg1[%c0_69, %c15, %c0_70, %c0_71] : memref<1x64x8x8xf32, #tpu.memory_space<vmem>>, vector<1x1x8x8xf32>
    %46 = vector.shape_cast %45 : vector<1x1x8x8xf32> to vector<8x8xf32>
    %c8_72 = arith.constant 8 : index
    %c56_73 = arith.constant 56 : index
    %47 = vector.load %arg5[%c8_72, %c56_73] : memref<64x64xf32, #tpu.memory_space<vmem>>, vector<8x8xf32>
    tpu.vector_store %arg5[%c8_72, %c56_73], %46 {strides = array<i32>} : memref<64x64xf32, #tpu.memory_space<vmem>>, vector<8x8xf32>,
    %c0_74 = arith.constant 0 : index
    %c16_75 = arith.constant 16 : index
    %c0_76 = arith.constant 0 : index
    %c0_77 = arith.constant 0 : index
    %48 = vector.load %arg1[%c0_74, %c16_75, %c0_76, %c0_77] : memref<1x64x8x8xf32, #tpu.memory_space<vmem>>, vector<1x1x8x8xf32>
    %49 = vector.shape_cast %48 : vector<1x1x8x8xf32> to vector<8x8xf32>
    %c16_78 = arith.constant 16 : index
    %c0_79 = arith.constant 0 : index
    %50 = vector.load %arg5[%c16_78, %c0_79] : memref<64x64xf32, #tpu.memory_space<vmem>>, vector<8x8xf32>
    tpu.vector_store %arg5[%c16_78, %c0_79], %49 {strides = array<i32>} : memref<64x64xf32, #tpu.memory_space<vmem>>, vector<8x8xf32>,
    %c0_80 = arith.constant 0 : index
    %c17 = arith.constant 17 : index
    %c0_81 = arith.constant 0 : index
    %c0_82 = arith.constant 0 : index
    %51 = vector.load %arg1[%c0_80, %c17, %c0_81, %c0_82] : memref<1x64x8x8xf32, #tpu.memory_space<vmem>>, vector<1x1x8x8xf32>
    %52 = vector.shape_cast %51 : vector<1x1x8x8xf32> to vector<8x8xf32>
    %c16_83 = arith.constant 16 : index
    %c8_84 = arith.constant 8 : index
    %53 = vector.load %arg5[%c16_83, %c8_84] : memref<64x64xf32, #tpu.memory_space<vmem>>, vector<8x8xf32>
    tpu.vector_store %arg5[%c16_83, %c8_84], %52 {strides = array<i32>} : memref<64x64xf32, #tpu.memory_space<vmem>>, vector<8x8xf32>,
    %c0_85 = arith.constant 0 : index
    %c18 = arith.constant 18 : index
    %c0_86 = arith.constant 0 : index
    %c0_87 = arith.constant 0 : index
    %54 = vector.load %arg1[%c0_85, %c18, %c0_86, %c0_87] : memref<1x64x8x8xf32, #tpu.memory_space<vmem>>, vector<1x1x8x8xf32>
    %55 = vector.shape_cast %54 : vector<1x1x8x8xf32> to vector<8x8xf32>
    %c16_88 = arith.constant 16 : index
    %c16_89 = arith.constant 16 : index
    %56 = vector.load %arg5[%c16_88, %c16_89] : memref<64x64xf32, #tpu.memory_space<vmem>>, vector<8x8xf32>
    tpu.vector_store %arg5[%c16_88, %c16_89], %55 {strides = array<i32>} : memref<64x64xf32, #tpu.memory_space<vmem>>, vector<8x8xf32>,
    %c0_90 = arith.constant 0 : index
    %c19 = arith.constant 19 : index
    %c0_91 = arith.constant 0 : index
    %c0_92 = arith.constant 0 : index
    %57 = vector.load %arg1[%c0_90, %c19, %c0_91, %c0_92] : memref<1x64x8x8xf32, #tpu.memory_space<vmem>>, vector<1x1x8x8xf32>
    %58 = vector.shape_cast %57 : vector<1x1x8x8xf32> to vector<8x8xf32>
    %c16_93 = arith.constant 16 : index
    %c24_94 = arith.constant 24 : index
    %59 = vector.load %arg5[%c16_93, %c24_94] : memref<64x64xf32, #tpu.memory_space<vmem>>, vector<8x8xf32>
    tpu.vector_store %arg5[%c16_93, %c24_94], %58 {strides = array<i32>} : memref<64x64xf32, #tpu.memory_space<vmem>>, vector<8x8xf32>,
    %c0_95 = arith.constant 0 : index
    %c20 = arith.constant 20 : index
    %c0_96 = arith.constant 0 : index
    %c0_97 = arith.constant 0 : index
    %60 = vector.load %arg1[%c0_95, %c20, %c0_96, %c0_97] : memref<1x64x8x8xf32, #tpu.memory_space<vmem>>, vector<1x1x8x8xf32>
    %61 = vector.shape_cast %60 : vector<1x1x8x8xf32> to vector<8x8xf32>
    %c16_98 = arith.constant 16 : index
    %c32_99 = arith.constant 32 : index
    %62 = vector.load %arg5[%c16_98, %c32_99] : memref<64x64xf32, #tpu.memory_space<vmem>>, vector<8x8xf32>
    tpu.vector_store %arg5[%c16_98, %c32_99], %61 {strides = array<i32>} : memref<64x64xf32, #tpu.memory_space<vmem>>, vector<8x8xf32>,
    %c0_100 = arith.constant 0 : index
    %c21 = arith.constant 21 : index
    %c0_101 = arith.constant 0 : index
    %c0_102 = arith.constant 0 : index
    %63 = vector.load %arg1[%c0_100, %c21, %c0_101, %c0_102] : memref<1x64x8x8xf32, #tpu.memory_space<vmem>>, vector<1x1x8x8xf32>
    %64 = vector.shape_cast %63 : vector<1x1x8x8xf32> to vector<8x8xf32>
    %c16_103 = arith.constant 16 : index
    %c40_104 = arith.constant 40 : index
    %65 = vector.load %arg5[%c16_103, %c40_104] : memref<64x64xf32, #tpu.memory_space<vmem>>, vector<8x8xf32>
    tpu.vector_store %arg5[%c16_103, %c40_104], %64 {strides = array<i32>} : memref<64x64xf32, #tpu.memory_space<vmem>>, vector<8x8xf32>,
    %c0_105 = arith.constant 0 : index
    %c22 = arith.constant 22 : index
    %c0_106 = arith.constant 0 : index
    %c0_107 = arith.constant 0 : index
    %66 = vector.load %arg1[%c0_105, %c22, %c0_106, %c0_107] : memref<1x64x8x8xf32, #tpu.memory_space<vmem>>, vector<1x1x8x8xf32>
    %67 = vector.shape_cast %66 : vector<1x1x8x8xf32> to vector<8x8xf32>
    %c16_108 = arith.constant 16 : index
    %c48_109 = arith.constant 48 : index
    %68 = vector.load %arg5[%c16_108, %c48_109] : memref<64x64xf32, #tpu.memory_space<vmem>>, vector<8x8xf32>
    tpu.vector_store %arg5[%c16_108, %c48_109], %67 {strides = array<i32>} : memref<64x64xf32, #tpu.memory_space<vmem>>, vector<8x8xf32>,
    %c0_110 = arith.constant 0 : index
    %c23 = arith.constant 23 : index
    %c0_111 = arith.constant 0 : index
    %c0_112 = arith.constant 0 : index
    %69 = vector.load %arg1[%c0_110, %c23, %c0_111, %c0_112] : memref<1x64x8x8xf32, #tpu.memory_space<vmem>>, vector<1x1x8x8xf32>
    %70 = vector.shape_cast %69 : vector<1x1x8x8xf32> to vector<8x8xf32>
    %c16_113 = arith.constant 16 : index
    %c56_114 = arith.constant 56 : index
    %71 = vector.load %arg5[%c16_113, %c56_114] : memref<64x64xf32, #tpu.memory_space<vmem>>, vector<8x8xf32>
    tpu.vector_store %arg5[%c16_113, %c56_114], %70 {strides = array<i32>} : memref<64x64xf32, #tpu.memory_space<vmem>>, vector<8x8xf32>,
    %c0_115 = arith.constant 0 : index
    %c24_116 = arith.constant 24 : index
    %c0_117 = arith.constant 0 : index
    %c0_118 = arith.constant 0 : index
    %72 = vector.load %arg1[%c0_115, %c24_116, %c0_117, %c0_118] : memref<1x64x8x8xf32, #tpu.memory_space<vmem>>, vector<1x1x8x8xf32>
    %73 = vector.shape_cast %72 : vector<1x1x8x8xf32> to vector<8x8xf32>
    %c24_119 = arith.constant 24 : index
    %c0_120 = arith.constant 0 : index
    %74 = vector.load %arg5[%c24_119, %c0_120] : memref<64x64xf32, #tpu.memory_space<vmem>>, vector<8x8xf32>
    tpu.vector_store %arg5[%c24_119, %c0_120], %73 {strides = array<i32>} : memref<64x64xf32, #tpu.memory_space<vmem>>, vector<8x8xf32>,
    %c0_121 = arith.constant 0 : index
    %c25 = arith.constant 25 : index
    %c0_122 = arith.constant 0 : index
    %c0_123 = arith.constant 0 : index
    %75 = vector.load %arg1[%c0_121, %c25, %c0_122, %c0_123] : memref<1x64x8x8xf32, #tpu.memory_space<vmem>>, vector<1x1x8x8xf32>
    %76 = vector.shape_cast %75 : vector<1x1x8x8xf32> to vector<8x8xf32>
    %c24_124 = arith.constant 24 : index
    %c8_125 = arith.constant 8 : index
    %77 = vector.load %arg5[%c24_124, %c8_125] : memref<64x64xf32, #tpu.memory_space<vmem>>, vector<8x8xf32>
    tpu.vector_store %arg5[%c24_124, %c8_125], %76 {strides = array<i32>} : memref<64x64xf32, #tpu.memory_space<vmem>>, vector<8x8xf32>,
    %c0_126 = arith.constant 0 : index
    %c26 = arith.constant 26 : index
    %c0_127 = arith.constant 0 : index
    %c0_128 = arith.constant 0 : index
    %78 = vector.load %arg1[%c0_126, %c26, %c0_127, %c0_128] : memref<1x64x8x8xf32, #tpu.memory_space<vmem>>, vector<1x1x8x8xf32>
    %79 = vector.shape_cast %78 : vector<1x1x8x8xf32> to vector<8x8xf32>
    %c24_129 = arith.constant 24 : index
    %c16_130 = arith.constant 16 : index
    %80 = vector.load %arg5[%c24_129, %c16_130] : memref<64x64xf32, #tpu.memory_space<vmem>>, vector<8x8xf32>
    tpu.vector_store %arg5[%c24_129, %c16_130], %79 {strides = array<i32>} : memref<64x64xf32, #tpu.memory_space<vmem>>, vector<8x8xf32>,
    %c0_131 = arith.constant 0 : index
    %c27 = arith.constant 27 : index
    %c0_132 = arith.constant 0 : index
    %c0_133 = arith.constant 0 : index
    %81 = vector.load %arg1[%c0_131, %c27, %c0_132, %c0_133] : memref<1x64x8x8xf32, #tpu.memory_space<vmem>>, vector<1x1x8x8xf32>
    %82 = vector.shape_cast %81 : vector<1x1x8x8xf32> to vector<8x8xf32>
    %c24_134 = arith.constant 24 : index
    %c24_135 = arith.constant 24 : index
    %83 = vector.load %arg5[%c24_134, %c24_135] : memref<64x64xf32, #tpu.memory_space<vmem>>, vector<8x8xf32>
    tpu.vector_store %arg5[%c24_134, %c24_135], %82 {strides = array<i32>} : memref<64x64xf32, #tpu.memory_space<vmem>>, vector<8x8xf32>,
    %c0_136 = arith.constant 0 : index
    %c28 = arith.constant 28 : index
    %c0_137 = arith.constant 0 : index
    %c0_138 = arith.constant 0 : index
    %84 = vector.load %arg1[%c0_136, %c28, %c0_137, %c0_138] : memref<1x64x8x8xf32, #tpu.memory_space<vmem>>, vector<1x1x8x8xf32>
    %85 = vector.shape_cast %84 : vector<1x1x8x8xf32> to vector<8x8xf32>
    %c24_139 = arith.constant 24 : index
    %c32_140 = arith.constant 32 : index
    %86 = vector.load %arg5[%c24_139, %c32_140] : memref<64x64xf32, #tpu.memory_space<vmem>>, vector<8x8xf32>
    tpu.vector_store %arg5[%c24_139, %c32_140], %85 {strides = array<i32>} : memref<64x64xf32, #tpu.memory_space<vmem>>, vector<8x8xf32>,
    %c0_141 = arith.constant 0 : index
    %c29 = arith.constant 29 : index
    %c0_142 = arith.constant 0 : index
    %c0_143 = arith.constant 0 : index
    %87 = vector.load %arg1[%c0_141, %c29, %c0_142, %c0_143] : memref<1x64x8x8xf32, #tpu.memory_space<vmem>>, vector<1x1x8x8xf32>
    %88 = vector.shape_cast %87 : vector<1x1x8x8xf32> to vector<8x8xf32>
    %c24_144 = arith.constant 24 : index
    %c40_145 = arith.constant 40 : index
    %89 = vector.load %arg5[%c24_144, %c40_145] : memref<64x64xf32, #tpu.memory_space<vmem>>, vector<8x8xf32>
    tpu.vector_store %arg5[%c24_144, %c40_145], %88 {strides = array<i32>} : memref<64x64xf32, #tpu.memory_space<vmem>>, vector<8x8xf32>,
    %c0_146 = arith.constant 0 : index
    %c30 = arith.constant 30 : index
    %c0_147 = arith.constant 0 : index
    %c0_148 = arith.constant 0 : index
    %90 = vector.load %arg1[%c0_146, %c30, %c0_147, %c0_148] : memref<1x64x8x8xf32, #tpu.memory_space<vmem>>, vector<1x1x8x8xf32>
    %91 = vector.shape_cast %90 : vector<1x1x8x8xf32> to vector<8x8xf32>
    %c24_149 = arith.constant 24 : index
    %c48_150 = arith.constant 48 : index
    %92 = vector.load %arg5[%c24_149, %c48_150] : memref<64x64xf32, #tpu.memory_space<vmem>>, vector<8x8xf32>
    tpu.vector_store %arg5[%c24_149, %c48_150], %91 {strides = array<i32>} : memref<64x64xf32, #tpu.memory_space<vmem>>, vector<8x8xf32>,
    %c0_151 = arith.constant 0 : index
    %c31 = arith.constant 31 : index
    %c0_152 = arith.constant 0 : index
    %c0_153 = arith.constant 0 : index
    %93 = vector.load %arg1[%c0_151, %c31, %c0_152, %c0_153] : memref<1x64x8x8xf32, #tpu.memory_space<vmem>>, vector<1x1x8x8xf32>
    %94 = vector.shape_cast %93 : vector<1x1x8x8xf32> to vector<8x8xf32>
    %c24_154 = arith.constant 24 : index
    %c56_155 = arith.constant 56 : index
    %95 = vector.load %arg5[%c24_154, %c56_155] : memref<64x64xf32, #tpu.memory_space<vmem>>, vector<8x8xf32>
    tpu.vector_store %arg5[%c24_154, %c56_155], %94 {strides = array<i32>} : memref<64x64xf32, #tpu.memory_space<vmem>>, vector<8x8xf32>,
    %c0_156 = arith.constant 0 : index
    %c32_157 = arith.constant 32 : index
    %c0_158 = arith.constant 0 : index
    %c0_159 = arith.constant 0 : index
    %96 = vector.load %arg1[%c0_156, %c32_157, %c0_158, %c0_159] : memref<1x64x8x8xf32, #tpu.memory_space<vmem>>, vector<1x1x8x8xf32>
    %97 = vector.shape_cast %96 : vector<1x1x8x8xf32> to vector<8x8xf32>
    %c32_160 = arith.constant 32 : index
    %c0_161 = arith.constant 0 : index
    %98 = vector.load %arg5[%c32_160, %c0_161] : memref<64x64xf32, #tpu.memory_space<vmem>>, vector<8x8xf32>
    tpu.vector_store %arg5[%c32_160, %c0_161], %97 {strides = array<i32>} : memref<64x64xf32, #tpu.memory_space<vmem>>, vector<8x8xf32>,
    %c0_162 = arith.constant 0 : index
    %c33 = arith.constant 33 : index
    %c0_163 = arith.constant 0 : index
    %c0_164 = arith.constant 0 : index
    %99 = vector.load %arg1[%c0_162, %c33, %c0_163, %c0_164] : memref<1x64x8x8xf32, #tpu.memory_space<vmem>>, vector<1x1x8x8xf32>
    %100 = vector.shape_cast %99 : vector<1x1x8x8xf32> to vector<8x8xf32>
    %c32_165 = arith.constant 32 : index
    %c8_166 = arith.constant 8 : index
    %101 = vector.load %arg5[%c32_165, %c8_166] : memref<64x64xf32, #tpu.memory_space<vmem>>, vector<8x8xf32>
    tpu.vector_store %arg5[%c32_165, %c8_166], %100 {strides = array<i32>} : memref<64x64xf32, #tpu.memory_space<vmem>>, vector<8x8xf32>,
    %c0_167 = arith.constant 0 : index
    %c34 = arith.constant 34 : index
    %c0_168 = arith.constant 0 : index
    %c0_169 = arith.constant 0 : index
    %102 = vector.load %arg1[%c0_167, %c34, %c0_168, %c0_169] : memref<1x64x8x8xf32, #tpu.memory_space<vmem>>, vector<1x1x8x8xf32>
    %103 = vector.shape_cast %102 : vector<1x1x8x8xf32> to vector<8x8xf32>
    %c32_170 = arith.constant 32 : index
    %c16_171 = arith.constant 16 : index
    %104 = vector.load %arg5[%c32_170, %c16_171] : memref<64x64xf32, #tpu.memory_space<vmem>>, vector<8x8xf32>
    tpu.vector_store %arg5[%c32_170, %c16_171], %103 {strides = array<i32>} : memref<64x64xf32, #tpu.memory_space<vmem>>, vector<8x8xf32>,
    %c0_172 = arith.constant 0 : index
    %c35 = arith.constant 35 : index
    %c0_173 = arith.constant 0 : index
    %c0_174 = arith.constant 0 : index
    %105 = vector.load %arg1[%c0_172, %c35, %c0_173, %c0_174] : memref<1x64x8x8xf32, #tpu.memory_space<vmem>>, vector<1x1x8x8xf32>
    %106 = vector.shape_cast %105 : vector<1x1x8x8xf32> to vector<8x8xf32>
    %c32_175 = arith.constant 32 : index
    %c24_176 = arith.constant 24 : index
    %107 = vector.load %arg5[%c32_175, %c24_176] : memref<64x64xf32, #tpu.memory_space<vmem>>, vector<8x8xf32>
    tpu.vector_store %arg5[%c32_175, %c24_176], %106 {strides = array<i32>} : memref<64x64xf32, #tpu.memory_space<vmem>>, vector<8x8xf32>,
    %c0_177 = arith.constant 0 : index
    %c36 = arith.constant 36 : index
    %c0_178 = arith.constant 0 : index
    %c0_179 = arith.constant 0 : index
    %108 = vector.load %arg1[%c0_177, %c36, %c0_178, %c0_179] : memref<1x64x8x8xf32, #tpu.memory_space<vmem>>, vector<1x1x8x8xf32>
    %109 = vector.shape_cast %108 : vector<1x1x8x8xf32> to vector<8x8xf32>
    %c32_180 = arith.constant 32 : index
    %c32_181 = arith.constant 32 : index
    %110 = vector.load %arg5[%c32_180, %c32_181] : memref<64x64xf32, #tpu.memory_space<vmem>>, vector<8x8xf32>
    tpu.vector_store %arg5[%c32_180, %c32_181], %109 {strides = array<i32>} : memref<64x64xf32, #tpu.memory_space<vmem>>, vector<8x8xf32>,
    %c0_182 = arith.constant 0 : index
    %c37 = arith.constant 37 : index
    %c0_183 = arith.constant 0 : index
    %c0_184 = arith.constant 0 : index
    %111 = vector.load %arg1[%c0_182, %c37, %c0_183, %c0_184] : memref<1x64x8x8xf32, #tpu.memory_space<vmem>>, vector<1x1x8x8xf32>
    %112 = vector.shape_cast %111 : vector<1x1x8x8xf32> to vector<8x8xf32>
    %c32_185 = arith.constant 32 : index
    %c40_186 = arith.constant 40 : index
    %113 = vector.load %arg5[%c32_185, %c40_186] : memref<64x64xf32, #tpu.memory_space<vmem>>, vector<8x8xf32>
    tpu.vector_store %arg5[%c32_185, %c40_186], %112 {strides = array<i32>} : memref<64x64xf32, #tpu.memory_space<vmem>>, vector<8x8xf32>,
    %c0_187 = arith.constant 0 : index
    %c38 = arith.constant 38 : index
    %c0_188 = arith.constant 0 : index
    %c0_189 = arith.constant 0 : index
    %114 = vector.load %arg1[%c0_187, %c38, %c0_188, %c0_189] : memref<1x64x8x8xf32, #tpu.memory_space<vmem>>, vector<1x1x8x8xf32>
    %115 = vector.shape_cast %114 : vector<1x1x8x8xf32> to vector<8x8xf32>
    %c32_190 = arith.constant 32 : index
    %c48_191 = arith.constant 48 : index
    %116 = vector.load %arg5[%c32_190, %c48_191] : memref<64x64xf32, #tpu.memory_space<vmem>>, vector<8x8xf32>
    tpu.vector_store %arg5[%c32_190, %c48_191], %115 {strides = array<i32>} : memref<64x64xf32, #tpu.memory_space<vmem>>, vector<8x8xf32>,
    %c0_192 = arith.constant 0 : index
    %c39 = arith.constant 39 : index
    %c0_193 = arith.constant 0 : index
    %c0_194 = arith.constant 0 : index
    %117 = vector.load %arg1[%c0_192, %c39, %c0_193, %c0_194] : memref<1x64x8x8xf32, #tpu.memory_space<vmem>>, vector<1x1x8x8xf32>
    %118 = vector.shape_cast %117 : vector<1x1x8x8xf32> to vector<8x8xf32>
    %c32_195 = arith.constant 32 : index
    %c56_196 = arith.constant 56 : index
    %119 = vector.load %arg5[%c32_195, %c56_196] : memref<64x64xf32, #tpu.memory_space<vmem>>, vector<8x8xf32>
    tpu.vector_store %arg5[%c32_195, %c56_196], %118 {strides = array<i32>} : memref<64x64xf32, #tpu.memory_space<vmem>>, vector<8x8xf32>,
    %c0_197 = arith.constant 0 : index
    %c40_198 = arith.constant 40 : index
    %c0_199 = arith.constant 0 : index
    %c0_200 = arith.constant 0 : index
    %120 = vector.load %arg1[%c0_197, %c40_198, %c0_199, %c0_200] : memref<1x64x8x8xf32, #tpu.memory_space<vmem>>, vector<1x1x8x8xf32>
    %121 = vector.shape_cast %120 : vector<1x1x8x8xf32> to vector<8x8xf32>
    %c40_201 = arith.constant 40 : index
    %c0_202 = arith.constant 0 : index
    %122 = vector.load %arg5[%c40_201, %c0_202] : memref<64x64xf32, #tpu.memory_space<vmem>>, vector<8x8xf32>
    tpu.vector_store %arg5[%c40_201, %c0_202], %121 {strides = array<i32>} : memref<64x64xf32, #tpu.memory_space<vmem>>, vector<8x8xf32>,
    %c0_203 = arith.constant 0 : index
    %c41 = arith.constant 41 : index
    %c0_204 = arith.constant 0 : index
    %c0_205 = arith.constant 0 : index
    %123 = vector.load %arg1[%c0_203, %c41, %c0_204, %c0_205] : memref<1x64x8x8xf32, #tpu.memory_space<vmem>>, vector<1x1x8x8xf32>
    %124 = vector.shape_cast %123 : vector<1x1x8x8xf32> to vector<8x8xf32>
    %c40_206 = arith.constant 40 : index
    %c8_207 = arith.constant 8 : index
    %125 = vector.load %arg5[%c40_206, %c8_207] : memref<64x64xf32, #tpu.memory_space<vmem>>, vector<8x8xf32>
    tpu.vector_store %arg5[%c40_206, %c8_207], %124 {strides = array<i32>} : memref<64x64xf32, #tpu.memory_space<vmem>>, vector<8x8xf32>,
    %c0_208 = arith.constant 0 : index
    %c42 = arith.constant 42 : index
    %c0_209 = arith.constant 0 : index
    %c0_210 = arith.constant 0 : index
    %126 = vector.load %arg1[%c0_208, %c42, %c0_209, %c0_210] : memref<1x64x8x8xf32, #tpu.memory_space<vmem>>, vector<1x1x8x8xf32>
    %127 = vector.shape_cast %126 : vector<1x1x8x8xf32> to vector<8x8xf32>
    %c40_211 = arith.constant 40 : index
    %c16_212 = arith.constant 16 : index
    %128 = vector.load %arg5[%c40_211, %c16_212] : memref<64x64xf32, #tpu.memory_space<vmem>>, vector<8x8xf32>
    tpu.vector_store %arg5[%c40_211, %c16_212], %127 {strides = array<i32>} : memref<64x64xf32, #tpu.memory_space<vmem>>, vector<8x8xf32>,
    %c0_213 = arith.constant 0 : index
    %c43 = arith.constant 43 : index
    %c0_214 = arith.constant 0 : index
    %c0_215 = arith.constant 0 : index
    %129 = vector.load %arg1[%c0_213, %c43, %c0_214, %c0_215] : memref<1x64x8x8xf32, #tpu.memory_space<vmem>>, vector<1x1x8x8xf32>
    %130 = vector.shape_cast %129 : vector<1x1x8x8xf32> to vector<8x8xf32>
    %c40_216 = arith.constant 40 : index
    %c24_217 = arith.constant 24 : index
    %131 = vector.load %arg5[%c40_216, %c24_217] : memref<64x64xf32, #tpu.memory_space<vmem>>, vector<8x8xf32>
    tpu.vector_store %arg5[%c40_216, %c24_217], %130 {strides = array<i32>} : memref<64x64xf32, #tpu.memory_space<vmem>>, vector<8x8xf32>,
    %c0_218 = arith.constant 0 : index
    %c44 = arith.constant 44 : index
    %c0_219 = arith.constant 0 : index
    %c0_220 = arith.constant 0 : index
    %132 = vector.load %arg1[%c0_218, %c44, %c0_219, %c0_220] : memref<1x64x8x8xf32, #tpu.memory_space<vmem>>, vector<1x1x8x8xf32>
    %133 = vector.shape_cast %132 : vector<1x1x8x8xf32> to vector<8x8xf32>
    %c40_221 = arith.constant 40 : index
    %c32_222 = arith.constant 32 : index
    %134 = vector.load %arg5[%c40_221, %c32_222] : memref<64x64xf32, #tpu.memory_space<vmem>>, vector<8x8xf32>
    tpu.vector_store %arg5[%c40_221, %c32_222], %133 {strides = array<i32>} : memref<64x64xf32, #tpu.memory_space<vmem>>, vector<8x8xf32>,
    %c0_223 = arith.constant 0 : index
    %c45 = arith.constant 45 : index
    %c0_224 = arith.constant 0 : index
    %c0_225 = arith.constant 0 : index
    %135 = vector.load %arg1[%c0_223, %c45, %c0_224, %c0_225] : memref<1x64x8x8xf32, #tpu.memory_space<vmem>>, vector<1x1x8x8xf32>
    %136 = vector.shape_cast %135 : vector<1x1x8x8xf32> to vector<8x8xf32>
    %c40_226 = arith.constant 40 : index
    %c40_227 = arith.constant 40 : index
    %137 = vector.load %arg5[%c40_226, %c40_227] : memref<64x64xf32, #tpu.memory_space<vmem>>, vector<8x8xf32>
    tpu.vector_store %arg5[%c40_226, %c40_227], %136 {strides = array<i32>} : memref<64x64xf32, #tpu.memory_space<vmem>>, vector<8x8xf32>,
    %c0_228 = arith.constant 0 : index
    %c46 = arith.constant 46 : index
    %c0_229 = arith.constant 0 : index
    %c0_230 = arith.constant 0 : index
    %138 = vector.load %arg1[%c0_228, %c46, %c0_229, %c0_230] : memref<1x64x8x8xf32, #tpu.memory_space<vmem>>, vector<1x1x8x8xf32>
    %139 = vector.shape_cast %138 : vector<1x1x8x8xf32> to vector<8x8xf32>
    %c40_231 = arith.constant 40 : index
    %c48_232 = arith.constant 48 : index
    %140 = vector.load %arg5[%c40_231, %c48_232] : memref<64x64xf32, #tpu.memory_space<vmem>>, vector<8x8xf32>
    tpu.vector_store %arg5[%c40_231, %c48_232], %139 {strides = array<i32>} : memref<64x64xf32, #tpu.memory_space<vmem>>, vector<8x8xf32>,
    %c0_233 = arith.constant 0 : index
    %c47 = arith.constant 47 : index
    %c0_234 = arith.constant 0 : index
    %c0_235 = arith.constant 0 : index
    %141 = vector.load %arg1[%c0_233, %c47, %c0_234, %c0_235] : memref<1x64x8x8xf32, #tpu.memory_space<vmem>>, vector<1x1x8x8xf32>
    %142 = vector.shape_cast %141 : vector<1x1x8x8xf32> to vector<8x8xf32>
    %c40_236 = arith.constant 40 : index
    %c56_237 = arith.constant 56 : index
    %143 = vector.load %arg5[%c40_236, %c56_237] : memref<64x64xf32, #tpu.memory_space<vmem>>, vector<8x8xf32>
    tpu.vector_store %arg5[%c40_236, %c56_237], %142 {strides = array<i32>} : memref<64x64xf32, #tpu.memory_space<vmem>>, vector<8x8xf32>,
    %c0_238 = arith.constant 0 : index
    %c48_239 = arith.constant 48 : index
    %c0_240 = arith.constant 0 : index
    %c0_241 = arith.constant 0 : index
    %144 = vector.load %arg1[%c0_238, %c48_239, %c0_240, %c0_241] : memref<1x64x8x8xf32, #tpu.memory_space<vmem>>, vector<1x1x8x8xf32>
    %145 = vector.shape_cast %144 : vector<1x1x8x8xf32> to vector<8x8xf32>
    %c48_242 = arith.constant 48 : index
    %c0_243 = arith.constant 0 : index
    %146 = vector.load %arg5[%c48_242, %c0_243] : memref<64x64xf32, #tpu.memory_space<vmem>>, vector<8x8xf32>
    tpu.vector_store %arg5[%c48_242, %c0_243], %145 {strides = array<i32>} : memref<64x64xf32, #tpu.memory_space<vmem>>, vector<8x8xf32>,
    %c0_244 = arith.constant 0 : index
    %c49 = arith.constant 49 : index
    %c0_245 = arith.constant 0 : index
    %c0_246 = arith.constant 0 : index
    %147 = vector.load %arg1[%c0_244, %c49, %c0_245, %c0_246] : memref<1x64x8x8xf32, #tpu.memory_space<vmem>>, vector<1x1x8x8xf32>
    %148 = vector.shape_cast %147 : vector<1x1x8x8xf32> to vector<8x8xf32>
    %c48_247 = arith.constant 48 : index
    %c8_248 = arith.constant 8 : index
    %149 = vector.load %arg5[%c48_247, %c8_248] : memref<64x64xf32, #tpu.memory_space<vmem>>, vector<8x8xf32>
    tpu.vector_store %arg5[%c48_247, %c8_248], %148 {strides = array<i32>} : memref<64x64xf32, #tpu.memory_space<vmem>>, vector<8x8xf32>,
    %c0_249 = arith.constant 0 : index
    %c50 = arith.constant 50 : index
    %c0_250 = arith.constant 0 : index
    %c0_251 = arith.constant 0 : index
    %150 = vector.load %arg1[%c0_249, %c50, %c0_250, %c0_251] : memref<1x64x8x8xf32, #tpu.memory_space<vmem>>, vector<1x1x8x8xf32>
    %151 = vector.shape_cast %150 : vector<1x1x8x8xf32> to vector<8x8xf32>
    %c48_252 = arith.constant 48 : index
    %c16_253 = arith.constant 16 : index
    %152 = vector.load %arg5[%c48_252, %c16_253] : memref<64x64xf32, #tpu.memory_space<vmem>>, vector<8x8xf32>
    tpu.vector_store %arg5[%c48_252, %c16_253], %151 {strides = array<i32>} : memref<64x64xf32, #tpu.memory_space<vmem>>, vector<8x8xf32>,
    %c0_254 = arith.constant 0 : index
    %c51 = arith.constant 51 : index
    %c0_255 = arith.constant 0 : index
    %c0_256 = arith.constant 0 : index
    %153 = vector.load %arg1[%c0_254, %c51, %c0_255, %c0_256] : memref<1x64x8x8xf32, #tpu.memory_space<vmem>>, vector<1x1x8x8xf32>
    %154 = vector.shape_cast %153 : vector<1x1x8x8xf32> to vector<8x8xf32>
    %c48_257 = arith.constant 48 : index
    %c24_258 = arith.constant 24 : index
    %155 = vector.load %arg5[%c48_257, %c24_258] : memref<64x64xf32, #tpu.memory_space<vmem>>, vector<8x8xf32>
    tpu.vector_store %arg5[%c48_257, %c24_258], %154 {strides = array<i32>} : memref<64x64xf32, #tpu.memory_space<vmem>>, vector<8x8xf32>,
    %c0_259 = arith.constant 0 : index
    %c52 = arith.constant 52 : index
    %c0_260 = arith.constant 0 : index
    %c0_261 = arith.constant 0 : index
    %156 = vector.load %arg1[%c0_259, %c52, %c0_260, %c0_261] : memref<1x64x8x8xf32, #tpu.memory_space<vmem>>, vector<1x1x8x8xf32>
    %157 = vector.shape_cast %156 : vector<1x1x8x8xf32> to vector<8x8xf32>
    %c48_262 = arith.constant 48 : index
    %c32_263 = arith.constant 32 : index
    %158 = vector.load %arg5[%c48_262, %c32_263] : memref<64x64xf32, #tpu.memory_space<vmem>>, vector<8x8xf32>
    tpu.vector_store %arg5[%c48_262, %c32_263], %157 {strides = array<i32>} : memref<64x64xf32, #tpu.memory_space<vmem>>, vector<8x8xf32>,
    %c0_264 = arith.constant 0 : index
    %c53 = arith.constant 53 : index
    %c0_265 = arith.constant 0 : index
    %c0_266 = arith.constant 0 : index
    %159 = vector.load %arg1[%c0_264, %c53, %c0_265, %c0_266] : memref<1x64x8x8xf32, #tpu.memory_space<vmem>>, vector<1x1x8x8xf32>
    %160 = vector.shape_cast %159 : vector<1x1x8x8xf32> to vector<8x8xf32>
    %c48_267 = arith.constant 48 : index
    %c40_268 = arith.constant 40 : index
    %161 = vector.load %arg5[%c48_267, %c40_268] : memref<64x64xf32, #tpu.memory_space<vmem>>, vector<8x8xf32>
    tpu.vector_store %arg5[%c48_267, %c40_268], %160 {strides = array<i32>} : memref<64x64xf32, #tpu.memory_space<vmem>>, vector<8x8xf32>,
    %c0_269 = arith.constant 0 : index
    %c54 = arith.constant 54 : index
    %c0_270 = arith.constant 0 : index
    %c0_271 = arith.constant 0 : index
    %162 = vector.load %arg1[%c0_269, %c54, %c0_270, %c0_271] : memref<1x64x8x8xf32, #tpu.memory_space<vmem>>, vector<1x1x8x8xf32>
    %163 = vector.shape_cast %162 : vector<1x1x8x8xf32> to vector<8x8xf32>
    %c48_272 = arith.constant 48 : index
    %c48_273 = arith.constant 48 : index
    %164 = vector.load %arg5[%c48_272, %c48_273] : memref<64x64xf32, #tpu.memory_space<vmem>>, vector<8x8xf32>
    tpu.vector_store %arg5[%c48_272, %c48_273], %163 {strides = array<i32>} : memref<64x64xf32, #tpu.memory_space<vmem>>, vector<8x8xf32>,
    %c0_274 = arith.constant 0 : index
    %c55 = arith.constant 55 : index
    %c0_275 = arith.constant 0 : index
    %c0_276 = arith.constant 0 : index
    %165 = vector.load %arg1[%c0_274, %c55, %c0_275, %c0_276] : memref<1x64x8x8xf32, #tpu.memory_space<vmem>>, vector<1x1x8x8xf32>
    %166 = vector.shape_cast %165 : vector<1x1x8x8xf32> to vector<8x8xf32>
    %c48_277 = arith.constant 48 : index
    %c56_278 = arith.constant 56 : index
    %167 = vector.load %arg5[%c48_277, %c56_278] : memref<64x64xf32, #tpu.memory_space<vmem>>, vector<8x8xf32>
    tpu.vector_store %arg5[%c48_277, %c56_278], %166 {strides = array<i32>} : memref<64x64xf32, #tpu.memory_space<vmem>>, vector<8x8xf32>,
    %c0_279 = arith.constant 0 : index
    %c56_280 = arith.constant 56 : index
    %c0_281 = arith.constant 0 : index
    %c0_282 = arith.constant 0 : index
    %168 = vector.load %arg1[%c0_279, %c56_280, %c0_281, %c0_282] : memref<1x64x8x8xf32, #tpu.memory_space<vmem>>, vector<1x1x8x8xf32>
    %169 = vector.shape_cast %168 : vector<1x1x8x8xf32> to vector<8x8xf32>
    %c56_283 = arith.constant 56 : index
    %c0_284 = arith.constant 0 : index
    %170 = vector.load %arg5[%c56_283, %c0_284] : memref<64x64xf32, #tpu.memory_space<vmem>>, vector<8x8xf32>
    tpu.vector_store %arg5[%c56_283, %c0_284], %169 {strides = array<i32>} : memref<64x64xf32, #tpu.memory_space<vmem>>, vector<8x8xf32>,
    %c0_285 = arith.constant 0 : index
    %c57 = arith.constant 57 : index
    %c0_286 = arith.constant 0 : index
    %c0_287 = arith.constant 0 : index
    %171 = vector.load %arg1[%c0_285, %c57, %c0_286, %c0_287] : memref<1x64x8x8xf32, #tpu.memory_space<vmem>>, vector<1x1x8x8xf32>
    %172 = vector.shape_cast %171 : vector<1x1x8x8xf32> to vector<8x8xf32>
    %c56_288 = arith.constant 56 : index
    %c8_289 = arith.constant 8 : index
    %173 = vector.load %arg5[%c56_288, %c8_289] : memref<64x64xf32, #tpu.memory_space<vmem>>, vector<8x8xf32>
    tpu.vector_store %arg5[%c56_288, %c8_289], %172 {strides = array<i32>} : memref<64x64xf32, #tpu.memory_space<vmem>>, vector<8x8xf32>,
    %c0_290 = arith.constant 0 : index
    %c58 = arith.constant 58 : index
    %c0_291 = arith.constant 0 : index
    %c0_292 = arith.constant 0 : index
    %174 = vector.load %arg1[%c0_290, %c58, %c0_291, %c0_292] : memref<1x64x8x8xf32, #tpu.memory_space<vmem>>, vector<1x1x8x8xf32>
    %175 = vector.shape_cast %174 : vector<1x1x8x8xf32> to vector<8x8xf32>
    %c56_293 = arith.constant 56 : index
    %c16_294 = arith.constant 16 : index
    %176 = vector.load %arg5[%c56_293, %c16_294] : memref<64x64xf32, #tpu.memory_space<vmem>>, vector<8x8xf32>
    tpu.vector_store %arg5[%c56_293, %c16_294], %175 {strides = array<i32>} : memref<64x64xf32, #tpu.memory_space<vmem>>, vector<8x8xf32>,
    %c0_295 = arith.constant 0 : index
    %c59 = arith.constant 59 : index
    %c0_296 = arith.constant 0 : index
    %c0_297 = arith.constant 0 : index
    %177 = vector.load %arg1[%c0_295, %c59, %c0_296, %c0_297] : memref<1x64x8x8xf32, #tpu.memory_space<vmem>>, vector<1x1x8x8xf32>
    %178 = vector.shape_cast %177 : vector<1x1x8x8xf32> to vector<8x8xf32>
    %c56_298 = arith.constant 56 : index
    %c24_299 = arith.constant 24 : index
    %179 = vector.load %arg5[%c56_298, %c24_299] : memref<64x64xf32, #tpu.memory_space<vmem>>, vector<8x8xf32>
    tpu.vector_store %arg5[%c56_298, %c24_299], %178 {strides = array<i32>} : memref<64x64xf32, #tpu.memory_space<vmem>>, vector<8x8xf32>,
    %c0_300 = arith.constant 0 : index
    %c60 = arith.constant 60 : index
    %c0_301 = arith.constant 0 : index
    %c0_302 = arith.constant 0 : index
    %180 = vector.load %arg1[%c0_300, %c60, %c0_301, %c0_302] : memref<1x64x8x8xf32, #tpu.memory_space<vmem>>, vector<1x1x8x8xf32>
    %181 = vector.shape_cast %180 : vector<1x1x8x8xf32> to vector<8x8xf32>
    %c56_303 = arith.constant 56 : index
    %c32_304 = arith.constant 32 : index
    %182 = vector.load %arg5[%c56_303, %c32_304] : memref<64x64xf32, #tpu.memory_space<vmem>>, vector<8x8xf32>
    tpu.vector_store %arg5[%c56_303, %c32_304], %181 {strides = array<i32>} : memref<64x64xf32, #tpu.memory_space<vmem>>, vector<8x8xf32>,
    %c0_305 = arith.constant 0 : index
    %c61 = arith.constant 61 : index
    %c0_306 = arith.constant 0 : index
    %c0_307 = arith.constant 0 : index
    %183 = vector.load %arg1[%c0_305, %c61, %c0_306, %c0_307] : memref<1x64x8x8xf32, #tpu.memory_space<vmem>>, vector<1x1x8x8xf32>
    %184 = vector.shape_cast %183 : vector<1x1x8x8xf32> to vector<8x8xf32>
    %c56_308 = arith.constant 56 : index
    %c40_309 = arith.constant 40 : index
    %185 = vector.load %arg5[%c56_308, %c40_309] : memref<64x64xf32, #tpu.memory_space<vmem>>, vector<8x8xf32>
    tpu.vector_store %arg5[%c56_308, %c40_309], %184 {strides = array<i32>} : memref<64x64xf32, #tpu.memory_space<vmem>>, vector<8x8xf32>,
    %c0_310 = arith.constant 0 : index
    %c62 = arith.constant 62 : index
    %c0_311 = arith.constant 0 : index
    %c0_312 = arith.constant 0 : index
    %186 = vector.load %arg1[%c0_310, %c62, %c0_311, %c0_312] : memref<1x64x8x8xf32, #tpu.memory_space<vmem>>, vector<1x1x8x8xf32>
    %187 = vector.shape_cast %186 : vector<1x1x8x8xf32> to vector<8x8xf32>
    %c56_313 = arith.constant 56 : index
    %c48_314 = arith.constant 48 : index
    %188 = vector.load %arg5[%c56_313, %c48_314] : memref<64x64xf32, #tpu.memory_space<vmem>>, vector<8x8xf32>
    tpu.vector_store %arg5[%c56_313, %c48_314], %187 {strides = array<i32>} : memref<64x64xf32, #tpu.memory_space<vmem>>, vector<8x8xf32>,
    %c0_315 = arith.constant 0 : index
    %c63 = arith.constant 63 : index
    %c0_316 = arith.constant 0 : index
    %c0_317 = arith.constant 0 : index
    %189 = vector.load %arg1[%c0_315, %c63, %c0_316, %c0_317] : memref<1x64x8x8xf32, #tpu.memory_space<vmem>>, vector<1x1x8x8xf32>
    %190 = vector.shape_cast %189 : vector<1x1x8x8xf32> to vector<8x8xf32>
    %c56_318 = arith.constant 56 : index
    %c56_319 = arith.constant 56 : index
    %191 = vector.load %arg5[%c56_318, %c56_319] : memref<64x64xf32, #tpu.memory_space<vmem>>, vector<8x8xf32>
    tpu.vector_store %arg5[%c56_318, %c56_319], %190 {strides = array<i32>} : memref<64x64xf32, #tpu.memory_space<vmem>>, vector<8x8xf32>,
    %c0_320 = arith.constant 0 : index
    %c0_321 = arith.constant 0 : index
    %192 = vector.load %arg5[%c0_320, %c0_321] : memref<64x64xf32, #tpu.memory_space<vmem>>, vector<64x64xf32>
    %c0_322 = arith.constant 0 : index
    %c0_323 = arith.constant 0 : index
    %193 = vector.load %arg2[%c0_322, %c0_323] : memref<64x128xf32, #tpu.memory_space<vmem>>, vector<64x128xf32>
    %cst = arith.constant dense<0.000000e+00> : vector<64x128xf32>
    %194 = tpu.matmul %192, %193, %cst {dimension_numbers = #tpu.dot_dimension_numbers<[1], [0], [0], [1], [0, 0, 1, 1], [], []>} : vector<64x64xf32>, vector<64x128xf32>, vector<64x128xf32> -> vector<64x128xf32>
    %c0_324 = arith.constant 0 : index
    %c0_325 = arith.constant 0 : index
    %195 = vector.load %arg3[%c0_324, %c0_325] : memref<64x128xf32, #tpu.memory_space<vmem>>, vector<64x128xf32>
    %196 = arith.addf %194, %195 : vector<64x128xf32>
    %c0_326 = arith.constant 0 : index
    %c0_327 = arith.constant 0 : index
    %c0_328 = arith.constant 0 : index
    %197 = vector.load %arg4[%c0_326, %c0_327, %c0_328] : memref<1x64x128xf32, #tpu.memory_space<vmem>>, vector<1x64x128xf32>
    %198 = vector.shape_cast %197 : vector<1x64x128xf32> to vector<64x128xf32>
    %199 = vector.shape_cast %196 : vector<64x128xf32> to vector<1x64x128xf32>
    tpu.vector_store %arg4[%c0_326, %c0_327, %c0_328], %199 {strides = array<i32>} : memref<1x64x128xf32, #tpu.memory_space<vmem>>, vector<1x64x128xf32>,
    return
  }
  func.func @transform_0(%arg0: i32) -> (i32, i32, i32, i32) {
    %c0_i32 = arith.constant 0 : i32
    %c0_i32_0 = arith.constant 0 : i32
    %c0_i32_1 = arith.constant 0 : i32
    %c0_i32_2 = arith.constant 0 : i32
    return %arg0, %c0_i32, %c0_i32_0, %c0_i32_1 : i32, i32, i32, i32
  }
  func.func @transform_1(%arg0: i32) -> (i32, i32) {
    %c0_i32 = arith.constant 0 : i32
    %c0_i32_0 = arith.constant 0 : i32
    %c0_i32_1 = arith.constant 0 : i32
    return %c0_i32, %c0_i32_0 : i32, i32
  }
  func.func @transform_2(%arg0: i32) -> (i32, i32) {
    %c0_i32 = arith.constant 0 : i32
    %c0_i32_0 = arith.constant 0 : i32
    %c0_i32_1 = arith.constant 0 : i32
    return %c0_i32, %c0_i32_0 : i32, i32
  }
  func.func @transform_3(%arg0: i32) -> (i32, i32, i32) {
    %c0_i32 = arith.constant 0 : i32
    %c0_i32_0 = arith.constant 0 : i32
    %c0_i32_1 = arith.constant 0 : i32
    return %arg0, %c0_i32, %c0_i32_0 : i32, i32, i32
  }
}

</mosaic_0001>

<llo_original>
// kernel: tpu_custom_call.1
$region0: #{tpu_custom_call.1}
  #allocation0 [shape = 'u32[]', space=smem, size = 0x4, offset = 0x4, fixed_abs, tag = 'smem constant byte address 0x4 - core index']
  #allocation1 [shape = 'u32[144,128]{1,0:T(1,128)}', space=vmem, size = 0x12000, scoped, tag = 'internal scratch']
  #allocation2 [shape = 'f32[64,64]{1,0:T(8,128)}', space=vmem, size = 0x8000, scoped, tag = 'scratch operand']
  %s0 = inlined_call_operand.vmem [shape: f32[2,64,8,8], index: 0, kind: input, shape index: {}]
  %s1 = inlined_call_operand.vmem [shape: f32[64,128], index: 1, kind: input, shape index: {}]
  %s2 = inlined_call_operand.vmem [shape: f32[64,128], index: 2, kind: input, shape index: {}]
  %s3 = inlined_call_operand.hbm [shape: f32[2,64,128], index: 3, kind: output, shape index: {}]
  %s4 = sld [smem:[#allocation0]]
  $region45: #{tpu_custom_call.1} parent=0
    _
  %s6 = ssub.s32 1, %s4
  %s7 = scalar_select 0, %s6, %s4
  $region1: #{tpu_custom_call.1} parent=0
    #allocation3 [shape = 'u8[65536]{0}', space=vmem, size = 0x10000, scoped, tag = 'output window, operand 0']
    #allocation4 [shape = 's32[2]{0}', space=sflag, size = 0x8, scoped, tag = 'scoped memory for tpu_custom_call.1']
    %8 = vsyncpa [#allocation4], 0
    %s9 = scalar_lea.sflag [#allocation4], 1
    %10 = vsyncpa %s9, 0
    loop: start=0, step=1, limit=4
    $region2: #{tpu_custom_call.1} parent=1 // loop_pre_header
      _
    $region3: #{tpu_custom_call.1} parent=1 // loop_header
      %s12 = sphi 0, %s16
      %p13 = scmp.ge.s32.totalorder %s12, 4
      %s22 = sphi 0, %s24
      %s25 = sphi 0, %s22
      %s26 = sphi 0, %s25
      %s42 = sphi 0, %s26
      %s46 = sphi 0, %s46
      %s48 = sphi 0, %s46
      %s49 = sphi 0, %s48
      %s63 = sphi 0, %s49
      %s67 = sphi 0, %s67
      %s69 = sphi 0, %s67
      %s70 = sphi 0, %s69
      %s84 = sphi 0, %s70
      %s90 = sphi 0, %s92
      %s93 = sphi 0, %s90
      %s94 = sphi 0, %s93
      %s110 = sphi 0, %s94
    $region4: #{tpu_custom_call.1} parent=1 // loop_header_branch
      %15 = sbr.rel (%p13) target = $region8
    $region5: #{tpu_custom_call.1} parent=1 // loop_body
      %s17 = ssub.s32 %s12, 1
      %s18 = ssub.s32 %s12, 2
      %s19 = sadd.s32 %s12, 1
      %s20 = ssub.s32 %s12, %s19
      %p21 = scmp.eq.s32.totalorder %s20, 0
      %s23 = sadd.s32 %s22, 1
      %s24 = scalar_select %p21, %s22, %s23
      %p27 = pneg %p21
      %p28 = scmp.eq.s32.totalorder %s12, 1
      %p29 = por %p27, %p28
      %p30 = scmp.ne.s32.totalorder %s22, %s25
      %p31 = scmp.eq.s32.totalorder %s12, 0
      %p32 = por %p30, %p31
      %p33 = scmp.ne.s32.totalorder %s22, %s25
      %p34 = scmp.eq.s32.totalorder %s17, 1
      %p35 = por %p33, %p34
      %p36 = scmp.ne.s32.totalorder %s25, %s26
      %p37 = scmp.eq.s32.totalorder %s17, 0
      %p38 = por %p36, %p37
      %p39 = scmp.ne.s32.totalorder %s25, %s26
      %p40 = scmp.eq.s32.totalorder %s18, 1
      %p41 = por %p39, %p40
      %p43 = scmp.ne.s32.totalorder %s26, %s42
      %p44 = scmp.eq.s32.totalorder %s18, 0
      %p45 = por %p43, %p44
      %s47 = sadd.s32 %s46, 1
      %p50 = scmp.eq.s32.totalorder %s12, 1
      %p51 = scmp.ne.s32.totalorder %s46, %s48
      %p52 = scmp.eq.s32.totalorder %s12, 0
      %p53 = por %p51, %p52
      %p54 = scmp.ne.s32.totalorder %s46, %s48
      %p55 = scmp.eq.s32.totalorder %s17, 1
      %p56 = por %p54, %p55
      %p57 = scmp.ne.s32.totalorder %s48, %s49
      %p58 = scmp.eq.s32.totalorder %s17, 0
      %p59 = por %p57, %p58
      %p60 = scmp.ne.s32.totalorder %s48, %s49
      %p61 = scmp.eq.s32.totalorder %s18, 1
      %p62 = por %p60, %p61
      %p64 = scmp.ne.s32.totalorder %s49, %s63
      %p65 = scmp.eq.s32.totalorder %s18, 0
      %p66 = por %p64, %p65
      %s68 = sadd.s32 %s67, 1
      %p71 = scmp.eq.s32.totalorder %s12, 1
      %p72 = scmp.ne.s32.totalorder %s67, %s69
      %p73 = scmp.eq.s32.totalorder %s12, 0
      %p74 = por %p72, %p73
      %p75 = scmp.ne.s32.totalorder %s67, %s69
      %p76 = scmp.eq.s32.totalorder %s17, 1
      %p77 = por %p75, %p76
      %p78 = scmp.ne.s32.totalorder %s69, %s70
      %p79 = scmp.eq.s32.totalorder %s17, 0
      %p80 = por %p78, %p79
      %p81 = scmp.ne.s32.totalorder %s69, %s70
      %p82 = scmp.eq.s32.totalorder %s18, 1
      %p83 = por %p81, %p82
      %p85 = scmp.ne.s32.totalorder %s70, %s84
      %p86 = scmp.eq.s32.totalorder %s18, 0
      %p87 = por %p85, %p86
      %s88 = ssub.s32 %s12, %s19
      %p89 = scmp.eq.s32.totalorder %s88, 0
      %s91 = sadd.s32 %s90, 1
      %s92 = scalar_select %p89, %s90, %s91
      %p95 = pneg %p89
      %p96 = scmp.eq.s32.totalorder %s12, 1
      %p97 = por %p95, %p96
      %p98 = scmp.ne.s32.totalorder %s90, %s93
      %p99 = scmp.eq.s32.totalorder %s12, 0
      %p100 = por %p98, %p99
      %p101 = scmp.ne.s32.totalorder %s90, %s93
      %p102 = scmp.eq.s32.totalorder %s17, 1
      %p103 = por %p101, %p102
      %p104 = scmp.ne.s32.totalorder %s93, %s94
      %p105 = scmp.eq.s32.totalorder %s17, 0
      %p106 = por %p104, %p105
      %p107 = scmp.ne.s32.totalorder %s93, %s94
      %p108 = scmp.eq.s32.totalorder %s18, 1
      %p109 = por %p107, %p108
      %p111 = scmp.ne.s32.totalorder %s94, %s110
      %p112 = scmp.eq.s32.totalorder %s18, 0
      %p113 = por %p111, %p112
      %p114 = scmp.le.s32.totalorder 1, %s12
      %p115 = scmp.lt.s32.totalorder %s12, 3
      %p116 = pnand %p114, %p115
      %p117 = pneg %p116
      // Predicated region
      $region9: #{tpu_custom_call.1} parent=5 // pred_check
        _
      $region10: #{tpu_custom_call.1} parent=5 // pred_check_branch
        %119 = sbr.rel (%p116) target = $region12
      $region11: #{tpu_custom_call.1} parent=5 // pred_region
        %s120 = ssub.s32 %s12, 1
        // Predicated region
        $region13: #{tpu_custom_call.1} parent=11 // pred_check
          %p121 = pneg %p59
        $region14: #{tpu_custom_call.1} parent=11 // pred_check_branch
          %123 = sbr.rel (%p121) target = $region16
        $region15: #{tpu_custom_call.1} parent=11 // pred_region
          _
        $region16: #{tpu_custom_call.1} parent=11 // pred_fallthru
          _
        // Predicated region
        $region17: #{tpu_custom_call.1} parent=11 // pred_check
          %p124 = pneg %p80
        $region18: #{tpu_custom_call.1} parent=11 // pred_check_branch
          %126 = sbr.rel (%p124) target = $region20
        $region19: #{tpu_custom_call.1} parent=11 // pred_region
          _
        $region20: #{tpu_custom_call.1} parent=11 // pred_fallthru
          _
      $region12: #{tpu_custom_call.1} parent=5 // pred_fallthru
        _
      %p127 = scmp.lt.s32.totalorder %s12, 2
      // Predicated region
      $region21: #{tpu_custom_call.1} parent=5 // pred_check
        %p128 = pneg %p127
      $region22: #{tpu_custom_call.1} parent=5 // pred_check_branch
        %130 = sbr.rel (%p128) target = $region24
      $region23: #{tpu_custom_call.1} parent=5 // pred_region
        // Predicated region
        $region25: #{tpu_custom_call.1} parent=23 // pred_check
          %p131 = pneg %p32
        $region26: #{tpu_custom_call.1} parent=23 // pred_check_branch
          %133 = sbr.rel (%p131) target = $region28
        $region27: #{tpu_custom_call.1} parent=23 // pred_region
          %p134 = scmp.lt.s32.totalorder %s12, 1
          %s135 = scalar_select %p134, %s12, 1
          %s136 = smul.addr %s135, 64
          %s137 = smul.addr %s136, 8
          %s138 = scalar_lea.vmem %s0, %s137
        $region28: #{tpu_custom_call.1} parent=23 // pred_fallthru
          _
      $region24: #{tpu_custom_call.1} parent=5 // pred_fallthru
        _
      %p139 = scmp.le.s32.totalorder 1, %s12
      %p140 = scmp.lt.s32.totalorder %s12, 3
      %p141 = pnand %p139, %p140
      %p142 = pneg %p141
      // Predicated region
      $region29: #{tpu_custom_call.1} parent=5 // pred_check
        _
      $region30: #{tpu_custom_call.1} parent=5 // pred_check_branch
        %144 = sbr.rel (%p141) target = $region32
      $region31: #{tpu_custom_call.1} parent=5 // pred_region
        %s145 = ssub.s32 %s12, 1
        %p146 = scmp.lt.s32.totalorder %s17, 1
        %s147 = scalar_select %p146, %s17, 1
        %s148 = smul.addr %s147, 64
        %s149 = smul.addr %s148, 8
        %s150 = scalar_lea.vmem %s0, %s149
        %p151 = pneg %p38
        %p152 = pneg %p35
        %p153 = pneg %p59
        %p154 = pneg %p56
        %p155 = pneg %p80
        %p156 = pneg %p77
        %p157 = pneg %p106
        %p158 = pneg %p103
        %s159 = sand.u32 %s93, 1
        %s160 = scalar_lea.sflag [#allocation4], %s159
        %s161 = sand.u32 %s93, 1
        %s162 = smul.addr %s161, 64
        %s163 = scalar_lea.vmem [#allocation3], %s162
        %p164 = scmp.lt.s32.totalorder %s17, 1
        %s165 = scalar_select %p164, %s17, 1
        %s166 = smul.addr %s165, 64
        %s167 = smul.addr %s166, 8
        %s168 = scalar_lea.vmem %s0, %s167
        %v169 = vld [vmem:[%s168] sm:$0xff]
        %vm170 = vcmask 64512
        %171 = vst.msk [vmem:[#allocation2] sm:$0xff] %vm170, %v169
        %s172 = scalar_lea.vmem %s168, 8
        %v173 = vld [vmem:[%s172] sm:$0xff]
        %175 = vrot.lane.b32.xlu0 %v173, 8
        %v176 = vpop.permute.xlu0 %175
        %vm178 = vcmask 130112
        %179 = vst.msk [vmem:[#allocation2] sm:$0xff] %vm178, %v176
        %s180 = scalar_lea.vmem %s168, 16
        %v181 = vld [vmem:[%s180] sm:$0xff]
        %183 = vrot.lane.b32.xlu0 %v181, 16
        %v184 = vpop.permute.xlu0 %183
        %vm186 = vcmask 195712
        %187 = vst.msk [vmem:[#allocation2] sm:$0xff] %vm186, %v184
        %s188 = scalar_lea.vmem %s168, 24
        %v189 = vld [vmem:[%s188] sm:$0xff]
        %191 = vrot.lane.b32.xlu0 %v189, 24
        %v192 = vpop.permute.xlu0 %191
        %vm194 = vcmask 261312
        %195 = vst.msk [vmem:[#allocation2] sm:$0xff] %vm194, %v192
        %s196 = scalar_lea.vmem %s168, 32
        %v197 = vld [vmem:[%s196] sm:$0xff]
        %199 = vrot.lane.b32.xlu0 %v197, 32
        %v200 = vpop.permute.xlu0 %199
        %vm202 = vcmask 326912
        %203 = vst.msk [vmem:[#allocation2] sm:$0xff] %vm202, %v200
        %s204 = scalar_lea.vmem %s168, 40
        %v205 = vld [vmem:[%s204] sm:$0xff]
        %207 = vrot.lane.b32.xlu0 %v205, 40
        %v208 = vpop.permute.xlu0 %207
        %vm210 = vcmask 392512
        %211 = vst.msk [vmem:[#allocation2] sm:$0xff] %vm210, %v208
        %s212 = scalar_lea.vmem %s168, 48
        %v213 = vld [vmem:[%s212] sm:$0xff]
        %215 = vrot.lane.b32.xlu0 %v213, 48
        %v216 = vpop.permute.xlu0 %215
        %vm218 = vcmask 458112
        %219 = vst.msk [vmem:[#allocation2] sm:$0xff] %vm218, %v216
        %s220 = scalar_lea.vmem %s168, 56
        %v221 = vld [vmem:[%s220] sm:$0xff]
        %223 = vrot.lane.b32.xlu0 %v221, 56
        %v224 = vpop.permute.xlu0 %223
        %vm226 = vcmask 523712
        %227 = vst.msk [vmem:[#allocation2] sm:$0xff] %vm226, %v224
        %s228 = scalar_lea.vmem %s168, 64
        %v229 = vld [vmem:[%s228] sm:$0xff]
        %230 = vst.msk [vmem:[#allocation2 + $0x8] sm:$0xff] %vm170, %v229
        %s231 = scalar_lea.vmem %s168, 72
        %v232 = vld [vmem:[%s231] sm:$0xff]
        %234 = vrot.lane.b32.xlu0 %v232, 8
        %v235 = vpop.permute.xlu0 %234
        %237 = vst.msk [vmem:[#allocation2 + $0x8] sm:$0xff] %vm178, %v235
        %s238 = scalar_lea.vmem %s168, 80
        %v239 = vld [vmem:[%s238] sm:$0xff]
        %241 = vrot.lane.b32.xlu0 %v239, 16
        %v242 = vpop.permute.xlu0 %241
        %244 = vst.msk [vmem:[#allocation2 + $0x8] sm:$0xff] %vm186, %v242
        %s245 = scalar_lea.vmem %s168, 88
        %v246 = vld [vmem:[%s245] sm:$0xff]
        %248 = vrot.lane.b32.xlu0 %v246, 24
        %v249 = vpop.permute.xlu0 %248
        %251 = vst.msk [vmem:[#allocation2 + $0x8] sm:$0xff] %vm194, %v249
        %s252 = scalar_lea.vmem %s168, 96
        %v253 = vld [vmem:[%s252] sm:$0xff]
        %255 = vrot.lane.b32.xlu0 %v253, 32
        %v256 = vpop.permute.xlu0 %255
        %258 = vst.msk [vmem:[#allocation2 + $0x8] sm:$0xff] %vm202, %v256
        %s259 = scalar_lea.vmem %s168, 104
        %v260 = vld [vmem:[%s259] sm:$0xff]
        %262 = vrot.lane.b32.xlu0 %v260, 40
        %v263 = vpop.permute.xlu0 %262
        %265 = vst.msk [vmem:[#allocation2 + $0x8] sm:$0xff] %vm210, %v263
        %s266 = scalar_lea.vmem %s168, 112
        %v267 = vld [vmem:[%s266] sm:$0xff]
        %269 = vrot.lane.b32.xlu0 %v267, 48
        %v270 = vpop.permute.xlu0 %269
        %272 = vst.msk [vmem:[#allocation2 + $0x8] sm:$0xff] %vm218, %v270
        %s273 = scalar_lea.vmem %s168, 120
        %v274 = vld [vmem:[%s273] sm:$0xff]
        %276 = vrot.lane.b32.xlu0 %v274, 56
        %v277 = vpop.permute.xlu0 %276
        %279 = vst.msk [vmem:[#allocation2 + $0x8] sm:$0xff] %vm226, %v277
        %s280 = scalar_lea.vmem %s168, 128
        %v281 = vld [vmem:[%s280] sm:$0xff]
        %282 = vst.msk [vmem:[#allocation2 + $0x10] sm:$0xff] %vm170, %v281
        %s283 = scalar_lea.vmem %s168, 136
        %v284 = vld [vmem:[%s283] sm:$0xff]
        %286 = vrot.lane.b32.xlu0 %v284, 8
        %v287 = vpop.permute.xlu0 %286
        %289 = vst.msk [vmem:[#allocation2 + $0x10] sm:$0xff] %vm178, %v287
        %s290 = scalar_lea.vmem %s168, 144
        %v291 = vld [vmem:[%s290] sm:$0xff]
        %293 = vrot.lane.b32.xlu0 %v291, 16
        %v294 = vpop.permute.xlu0 %293
        %296 = vst.msk [vmem:[#allocation2 + $0x10] sm:$0xff] %vm186, %v294
        %s297 = scalar_lea.vmem %s168, 152
        %v298 = vld [vmem:[%s297] sm:$0xff]
        %300 = vrot.lane.b32.xlu0 %v298, 24
        %v301 = vpop.permute.xlu0 %300
        %303 = vst.msk [vmem:[#allocation2 + $0x10] sm:$0xff] %vm194, %v301
        %s304 = scalar_lea.vmem %s168, 160
        %v305 = vld [vmem:[%s304] sm:$0xff]
        %307 = vrot.lane.b32.xlu0 %v305, 32
        %v308 = vpop.permute.xlu0 %307
        %310 = vst.msk [vmem:[#allocation2 + $0x10] sm:$0xff] %vm202, %v308
        %s311 = scalar_lea.vmem %s168, 168
        %v312 = vld [vmem:[%s311] sm:$0xff]
        %314 = vrot.lane.b32.xlu0 %v312, 40
        %v315 = vpop.permute.xlu0 %314
        %317 = vst.msk [vmem:[#allocation2 + $0x10] sm:$0xff] %vm210, %v315
        %s318 = scalar_lea.vmem %s168, 176
        %v319 = vld [vmem:[%s318] sm:$0xff]
        %321 = vrot.lane.b32.xlu0 %v319, 48
        %v322 = vpop.permute.xlu0 %321
        %324 = vst.msk [vmem:[#allocation2 + $0x10] sm:$0xff] %vm218, %v322
        %s325 = scalar_lea.vmem %s168, 184
        %v326 = vld [vmem:[%s325] sm:$0xff]
        %328 = vrot.lane.b32.xlu0 %v326, 56
        %v329 = vpop.permute.xlu0 %328
        %331 = vst.msk [vmem:[#allocation2 + $0x10] sm:$0xff] %vm226, %v329
        %s332 = scalar_lea.vmem %s168, 192
        %v333 = vld [vmem:[%s332] sm:$0xff]
        %334 = vst.msk [vmem:[#allocation2 + $0x18] sm:$0xff] %vm170, %v333
        %s335 = scalar_lea.vmem %s168, 200
        %v336 = vld [vmem:[%s335] sm:$0xff]
        %338 = vrot.lane.b32.xlu0 %v336, 8
        %v339 = vpop.permute.xlu0 %338
        %341 = vst.msk [vmem:[#allocation2 + $0x18] sm:$0xff] %vm178, %v339
        %s342 = scalar_lea.vmem %s168, 208
        %v343 = vld [vmem:[%s342] sm:$0xff]
        %345 = vrot.lane.b32.xlu0 %v343, 16
        %v346 = vpop.permute.xlu0 %345
        %348 = vst.msk [vmem:[#allocation2 + $0x18] sm:$0xff] %vm186, %v346
        %s349 = scalar_lea.vmem %s168, 216
        %v350 = vld [vmem:[%s349] sm:$0xff]
        %352 = vrot.lane.b32.xlu0 %v350, 24
        %v353 = vpop.permute.xlu0 %352
        %355 = vst.msk [vmem:[#allocation2 + $0x18] sm:$0xff] %vm194, %v353
        %s356 = scalar_lea.vmem %s168, 224
        %v357 = vld [vmem:[%s356] sm:$0xff]
        %359 = vrot.lane.b32.xlu0 %v357, 32
        %v360 = vpop.permute.xlu0 %359
        %362 = vst.msk [vmem:[#allocation2 + $0x18] sm:$0xff] %vm202, %v360
        %s363 = scalar_lea.vmem %s168, 232
        %v364 = vld [vmem:[%s363] sm:$0xff]
        %366 = vrot.lane.b32.xlu0 %v364, 40
        %v367 = vpop.permute.xlu0 %366
        %369 = vst.msk [vmem:[#allocation2 + $0x18] sm:$0xff] %vm210, %v367
        %s370 = scalar_lea.vmem %s168, 240
        %v371 = vld [vmem:[%s370] sm:$0xff]
        %373 = vrot.lane.b32.xlu0 %v371, 48
        %v374 = vpop.permute.xlu0 %373
        %376 = vst.msk [vmem:[#allocation2 + $0x18] sm:$0xff] %vm218, %v374
        %s377 = scalar_lea.vmem %s168, 248
        %v378 = vld [vmem:[%s377] sm:$0xff]
        %380 = vrot.lane.b32.xlu0 %v378, 56
        %v381 = vpop.permute.xlu0 %380
        %383 = vst.msk [vmem:[#allocation2 + $0x18] sm:$0xff] %vm226, %v381
        %s384 = scalar_lea.vmem %s168, 256
        %v385 = vld [vmem:[%s384] sm:$0xff]
        %386 = vst.msk [vmem:[#allocation2 + $0x20] sm:$0xff] %vm170, %v385
        %s387 = scalar_lea.vmem %s168, 264
        %v388 = vld [vmem:[%s387] sm:$0xff]
        %390 = vrot.lane.b32.xlu0 %v388, 8
        %v391 = vpop.permute.xlu0 %390
        %393 = vst.msk [vmem:[#allocation2 + $0x20] sm:$0xff] %vm178, %v391
        %s394 = scalar_lea.vmem %s168, 272
        %v395 = vld [vmem:[%s394] sm:$0xff]
        %397 = vrot.lane.b32.xlu0 %v395, 16
        %v398 = vpop.permute.xlu0 %397
        %400 = vst.msk [vmem:[#allocation2 + $0x20] sm:$0xff] %vm186, %v398
        %s401 = scalar_lea.vmem %s168, 280
        %v402 = vld [vmem:[%s401] sm:$0xff]
        %404 = vrot.lane.b32.xlu0 %v402, 24
        %v405 = vpop.permute.xlu0 %404
        %407 = vst.msk [vmem:[#allocation2 + $0x20] sm:$0xff] %vm194, %v405
        %s408 = scalar_lea.vmem %s168, 288
        %v409 = vld [vmem:[%s408] sm:$0xff]
        %411 = vrot.lane.b32.xlu0 %v409, 32
        %v412 = vpop.permute.xlu0 %411
        %414 = vst.msk [vmem:[#allocation2 + $0x20] sm:$0xff] %vm202, %v412
        %s415 = scalar_lea.vmem %s168, 296
        %v416 = vld [vmem:[%s415] sm:$0xff]
        %418 = vrot.lane.b32.xlu0 %v416, 40
        %v419 = vpop.permute.xlu0 %418
        %421 = vst.msk [vmem:[#allocation2 + $0x20] sm:$0xff] %vm210, %v419
        %s422 = scalar_lea.vmem %s168, 304
        %v423 = vld [vmem:[%s422] sm:$0xff]
        %425 = vrot.lane.b32.xlu0 %v423, 48
        %v426 = vpop.permute.xlu0 %425
        %428 = vst.msk [vmem:[#allocation2 + $0x20] sm:$0xff] %vm218, %v426
        %s429 = scalar_lea.vmem %s168, 312
        %v430 = vld [vmem:[%s429] sm:$0xff]
        %432 = vrot.lane.b32.xlu0 %v430, 56
        %v433 = vpop.permute.xlu0 %432
        %435 = vst.msk [vmem:[#allocation2 + $0x20] sm:$0xff] %vm226, %v433
        %s436 = scalar_lea.vmem %s168, 320
        %v437 = vld [vmem:[%s436] sm:$0xff]
        %438 = vst.msk [vmem:[#allocation2 + $0x28] sm:$0xff] %vm170, %v437
        %s439 = scalar_lea.vmem %s168, 328
        %v440 = vld [vmem:[%s439] sm:$0xff]
        %442 = vrot.lane.b32.xlu0 %v440, 8
        %v443 = vpop.permute.xlu0 %442
        %445 = vst.msk [vmem:[#allocation2 + $0x28] sm:$0xff] %vm178, %v443
        %s446 = scalar_lea.vmem %s168, 336
        %v447 = vld [vmem:[%s446] sm:$0xff]
        %449 = vrot.lane.b32.xlu0 %v447, 16
        %v450 = vpop.permute.xlu0 %449
        %452 = vst.msk [vmem:[#allocation2 + $0x28] sm:$0xff] %vm186, %v450
        %s453 = scalar_lea.vmem %s168, 344
        %v454 = vld [vmem:[%s453] sm:$0xff]
        %456 = vrot.lane.b32.xlu0 %v454, 24
        %v457 = vpop.permute.xlu0 %456
        %459 = vst.msk [vmem:[#allocation2 + $0x28] sm:$0xff] %vm194, %v457
        %s460 = scalar_lea.vmem %s168, 352
        %v461 = vld [vmem:[%s460] sm:$0xff]
        %463 = vrot.lane.b32.xlu0 %v461, 32
        %v464 = vpop.permute.xlu0 %463
        %466 = vst.msk [vmem:[#allocation2 + $0x28] sm:$0xff] %vm202, %v464
        %s467 = scalar_lea.vmem %s168, 360
        %v468 = vld [vmem:[%s467] sm:$0xff]
        %470 = vrot.lane.b32.xlu0 %v468, 40
        %v471 = vpop.permute.xlu0 %470
        %473 = vst.msk [vmem:[#allocation2 + $0x28] sm:$0xff] %vm210, %v471
        %s474 = scalar_lea.vmem %s168, 368
        %v475 = vld [vmem:[%s474] sm:$0xff]
        %477 = vrot.lane.b32.xlu0 %v475, 48
        %v478 = vpop.permute.xlu0 %477
        %480 = vst.msk [vmem:[#allocation2 + $0x28] sm:$0xff] %vm218, %v478
        %s481 = scalar_lea.vmem %s168, 376
        %v482 = vld [vmem:[%s481] sm:$0xff]
        %484 = vrot.lane.b32.xlu0 %v482, 56
        %v485 = vpop.permute.xlu0 %484
        %487 = vst.msk [vmem:[#allocation2 + $0x28] sm:$0xff] %vm226, %v485
        %s488 = scalar_lea.vmem %s168, 384
        %v489 = vld [vmem:[%s488] sm:$0xff]
        %490 = vst.msk [vmem:[#allocation2 + $0x30] sm:$0xff] %vm170, %v489
        %s491 = scalar_lea.vmem %s168, 392
        %v492 = vld [vmem:[%s491] sm:$0xff]
        %494 = vrot.lane.b32.xlu0 %v492, 8
        %v495 = vpop.permute.xlu0 %494
        %497 = vst.msk [vmem:[#allocation2 + $0x30] sm:$0xff] %vm178, %v495
        %s498 = scalar_lea.vmem %s168, 400
        %v499 = vld [vmem:[%s498] sm:$0xff]
        %501 = vrot.lane.b32.xlu0 %v499, 16
        %v502 = vpop.permute.xlu0 %501
        %504 = vst.msk [vmem:[#allocation2 + $0x30] sm:$0xff] %vm186, %v502
        %s505 = scalar_lea.vmem %s168, 408
        %v506 = vld [vmem:[%s505] sm:$0xff]
        %508 = vrot.lane.b32.xlu0 %v506, 24
        %v509 = vpop.permute.xlu0 %508
        %511 = vst.msk [vmem:[#allocation2 + $0x30] sm:$0xff] %vm194, %v509
        %s512 = scalar_lea.vmem %s168, 416
        %v513 = vld [vmem:[%s512] sm:$0xff]
        %515 = vrot.lane.b32.xlu0 %v513, 32
        %v516 = vpop.permute.xlu0 %515
        %518 = vst.msk [vmem:[#allocation2 + $0x30] sm:$0xff] %vm202, %v516
        %s519 = scalar_lea.vmem %s168, 424
        %v520 = vld [vmem:[%s519] sm:$0xff]
        %522 = vrot.lane.b32.xlu0 %v520, 40
        %v523 = vpop.permute.xlu0 %522
        %525 = vst.msk [vmem:[#allocation2 + $0x30] sm:$0xff] %vm210, %v523
        %s526 = scalar_lea.vmem %s168, 432
        %v527 = vld [vmem:[%s526] sm:$0xff]
        %529 = vrot.lane.b32.xlu0 %v527, 48
        %v530 = vpop.permute.xlu0 %529
        %532 = vst.msk [vmem:[#allocation2 + $0x30] sm:$0xff] %vm218, %v530
        %s533 = scalar_lea.vmem %s168, 440
        %v534 = vld [vmem:[%s533] sm:$0xff]
        %536 = vrot.lane.b32.xlu0 %v534, 56
        %v537 = vpop.permute.xlu0 %536
        %539 = vst.msk [vmem:[#allocation2 + $0x30] sm:$0xff] %vm226, %v537
        %s540 = scalar_lea.vmem %s168, 448
        %v541 = vld [vmem:[%s540] sm:$0xff]
        %542 = vst.msk [vmem:[#allocation2 + $0x38] sm:$0xff] %vm170, %v541
        %s543 = scalar_lea.vmem %s168, 456
        %v544 = vld [vmem:[%s543] sm:$0xff]
        %546 = vrot.lane.b32.xlu0 %v544, 8
        %v547 = vpop.permute.xlu0 %546
        %549 = vst.msk [vmem:[#allocation2 + $0x38] sm:$0xff] %vm178, %v547
        %s550 = scalar_lea.vmem %s168, 464
        %v551 = vld [vmem:[%s550] sm:$0xff]
        %553 = vrot.lane.b32.xlu0 %v551, 16
        %v554 = vpop.permute.xlu0 %553
        %556 = vst.msk [vmem:[#allocation2 + $0x38] sm:$0xff] %vm186, %v554
        %s557 = scalar_lea.vmem %s168, 472
        %v558 = vld [vmem:[%s557] sm:$0xff]
        %560 = vrot.lane.b32.xlu0 %v558, 24
        %v561 = vpop.permute.xlu0 %560
        %563 = vst.msk [vmem:[#allocation2 + $0x38] sm:$0xff] %vm194, %v561
        %s564 = scalar_lea.vmem %s168, 480
        %v565 = vld [vmem:[%s564] sm:$0xff]
        %567 = vrot.lane.b32.xlu0 %v565, 32
        %v568 = vpop.permute.xlu0 %567
        %570 = vst.msk [vmem:[#allocation2 + $0x38] sm:$0xff] %vm202, %v568
        %s571 = scalar_lea.vmem %s168, 488
        %v572 = vld [vmem:[%s571] sm:$0xff]
        %574 = vrot.lane.b32.xlu0 %v572, 40
        %v575 = vpop.permute.xlu0 %574
        %577 = vst.msk [vmem:[#allocation2 + $0x38] sm:$0xff] %vm210, %v575
        %s578 = scalar_lea.vmem %s168, 496
        %v579 = vld [vmem:[%s578] sm:$0xff]
        %581 = vrot.lane.b32.xlu0 %v579, 48
        %v582 = vpop.permute.xlu0 %581
        %584 = vst.msk [vmem:[#allocation2 + $0x38] sm:$0xff] %vm218, %v582
        %s585 = scalar_lea.vmem %s168, 504
        %v586 = vld [vmem:[%s585] sm:$0xff]
        %588 = vrot.lane.b32.xlu0 %v586, 56
        %v589 = vpop.permute.xlu0 %588
        %591 = vst.msk [vmem:[#allocation2 + $0x38] sm:$0xff] %vm226, %v589
        %v592 = vld [vmem:[#allocation2] sm:$0xff]
        %v593 = vld [vmem:[#allocation2 + $0x8] sm:$0xff]
        %v594 = vld [vmem:[#allocation2 + $0x10] sm:$0xff]
        %v595 = vld [vmem:[#allocation2 + $0x18] sm:$0xff]
        %v596 = vld [vmem:[#allocation2 + $0x20] sm:$0xff]
        %v597 = vld [vmem:[#allocation2 + $0x28] sm:$0xff]
        %v598 = vld [vmem:[#allocation2 + $0x30] sm:$0xff]
        %v599 = vld [vmem:[#allocation2 + $0x38] sm:$0xff]
        %v600 = vld [vmem:[%s1] sm:$0xff]
        %v601 = vld [vmem:[%s1 + $0x8] sm:$0xff]
        %v602 = vld [vmem:[%s1 + $0x10] sm:$0xff]
        %v603 = vld [vmem:[%s1 + $0x18] sm:$0xff]
        %v604 = vld [vmem:[%s1 + $0x20] sm:$0xff]
        %v605 = vld [vmem:[%s1 + $0x28] sm:$0xff]
        %v606 = vld [vmem:[%s1 + $0x30] sm:$0xff]
        %v607 = vld [vmem:[%s1 + $0x38] sm:$0xff]
        %v608 = vld [vmem:[%s2] sm:$0xff]
        %v609 = vld [vmem:[%s2 + $0x8] sm:$0xff]
        %v610 = vld [vmem:[%s2 + $0x10] sm:$0xff]
        %v611 = vld [vmem:[%s2 + $0x18] sm:$0xff]
        %v612 = vld [vmem:[%s2 + $0x20] sm:$0xff]
        %v613 = vld [vmem:[%s2 + $0x28] sm:$0xff]
        %v614 = vld [vmem:[%s2 + $0x30] sm:$0xff]
        %v615 = vld [vmem:[%s2 + $0x38] sm:$0xff]
        %vm616 = vcmask 523264
        %v618 = vsel %vm616, %v592, 0
        %v621 = vsel %vm616, %v593, 0
        %v624 = vsel %vm616, %v594, 0
        %v627 = vsel %vm616, %v595, 0
        %v630 = vsel %vm616, %v596, 0
        %v633 = vsel %vm616, %v597, 0
        %v636 = vsel %vm616, %v598, 0
        %v639 = vsel %vm616, %v599, 0
        %641 = vmatprep.subr.mxu0 0.0
        %642 = vmatpush1.msra.mxu0 %v600
        %643 = vmatprep.subr.mxu0 0.0
        %644 = vmatpush1.msra.mxu0 %v601
        %645 = vmatprep.subr.mxu0 0.0
        %646 = vmatpush1.msra.mxu0 %v602
        %647 = vmatprep.subr.mxu0 0.0
        %648 = vmatpush1.msra.mxu0 %v603
        %649 = vmatprep.subr.mxu0 0.0
        %650 = vmatpush1.msra.mxu0 %v604
        %651 = vmatprep.subr.mxu0 0.0
        %652 = vmatpush1.msra.mxu0 %v605
        %653 = vmatprep.subr.mxu0 0.0
        %654 = vmatpush1.msra.mxu0 %v606
        %655 = vmatprep.subr.mxu0 0.0
        %656 = vmatpush1.msra.mxu0 %v607
        %657 = vmatprep.subr.mxu0 0.0
        %658 = vmatpush1.msra.mxu0 0.0
        %659 = vmatprep.subr.mxu0 0.0
        %660 = vmatpush1.msra.mxu0 0.0
        %661 = vmatprep.subr.mxu0 0.0
        %662 = vmatpush1.msra.mxu0 0.0
        %663 = vmatprep.subr.mxu0 0.0
        %664 = vmatpush1.msra.mxu0 0.0
        %665 = vmatprep.subr.mxu0 0.0
        %666 = vmatpush1.msra.mxu0 0.0
        %667 = vmatprep.subr.mxu0 0.0
        %668 = vmatpush1.msra.mxu0 0.0
        %669 = vmatprep.subr.mxu0 0.0
        %670 = vmatpush1.msra.mxu0 0.0
        %671 = vmatprep.subr.mxu0 0.0
        %672 = vmatpush1.msra.mxu0 0.0
        %673 = vmatprep.subr.mxu0 0.0
        %674 = vmatpush1.msra.mxu0 0.0
        %675 = vmatprep.subr.mxu0 0.0
        %676 = vmatpush1.msra.mxu0 0.0
        %677 = vmatprep.subr.mxu0 0.0
        %678 = vmatpush1.msra.mxu0 0.0
        %679 = vmatprep.subr.mxu0 0.0
        %680 = vmatpush1.msra.mxu0 0.0
        %681 = vmatprep.subr.mxu0 0.0
        %682 = vmatpush1.msra.mxu0 0.0
        %683 = vmatprep.subr.mxu0 0.0
        %684 = vmatpush1.msra.mxu0 0.0
        %685 = vmatprep.subr.mxu0 0.0
        %686 = vmatpush1.msra.mxu0 0.0
        %687 = vmatprep.subr.mxu0 0.0
        %688 = vmatpush1.msra.mxu0 0.0
        %689 = vmatprep.subr.mxu0 0.0
        %690 = vmatpush1.msra.mxu0 0.0
        %691 = vmatprep.subr.mxu0 0.0
        %692 = vmatpush1.msra.mxu0 0.0
        %693 = vmatprep.subr.mxu0 0.0
        %694 = vmatpush1.msra.mxu0 0.0
        %695 = vmatprep.subr.mxu0 0.0
        %696 = vmatpush1.msra.mxu0 0.0
        %697 = vmatprep.subr.mxu0 0.0
        %698 = vmatpush1.msra.mxu0 0.0
        %699 = vmatprep.subr.mxu0 0.0
        %700 = vmatpush1.msra.mxu0 0.0
        %701 = vmatprep.subr.mxu0 0.0
        %702 = vmatpush1.msra.mxu0 0.0
        %703 = vmatprep.subr.mxu0 0.0
        %704 = vmatpush1.msra.mxu0 0.0
        %705 = vmatprep.mubr.f32.mxu0 0.0
        %706 = vmatmul.mubr.f32.gmra.mrb[0].mxu0 %v618
        %v707 = vpop.f32.mrb[0].mxu0
        %v708 = vadd.f32 %v608, %v707
        %v709 = vpop.f32.mrb[0].mxu0
        %710 = vmatprep.mubr.f32.mxu0 0.0
        %711 = vmatmul.mubr.f32.gmra.mrb[0].mxu0 %v621
        %v712 = vpop.f32.mrb[0].mxu0
        %v713 = vadd.f32 %v609, %v712
        %v714 = vpop.f32.mrb[0].mxu0
        %715 = vmatprep.mubr.f32.mxu0 0.0
        %716 = vmatmul.mubr.f32.gmra.mrb[0].mxu0 %v624
        %v717 = vpop.f32.mrb[0].mxu0
        %v718 = vadd.f32 %v610, %v717
        %v719 = vpop.f32.mrb[0].mxu0
        %720 = vmatprep.mubr.f32.mxu0 0.0
        %721 = vmatmul.mubr.f32.gmra.mrb[0].mxu0 %v627
        %v722 = vpop.f32.mrb[0].mxu0
        %v723 = vadd.f32 %v611, %v722
        %v724 = vpop.f32.mrb[0].mxu0
        %725 = vmatprep.mubr.f32.mxu0 0.0
        %726 = vmatmul.mubr.f32.gmra.mrb[0].mxu0 %v630
        %v727 = vpop.f32.mrb[0].mxu0
        %v728 = vadd.f32 %v612, %v727
        %v729 = vpop.f32.mrb[0].mxu0
        %730 = vmatprep.mubr.f32.mxu0 0.0
        %731 = vmatmul.mubr.f32.gmra.mrb[0].mxu0 %v633
        %v732 = vpop.f32.mrb[0].mxu0
        %v733 = vadd.f32 %v613, %v732
        %v734 = vpop.f32.mrb[0].mxu0
        %735 = vmatprep.mubr.f32.mxu0 0.0
        %736 = vmatmul.mubr.f32.gmra.mrb[0].mxu0 %v636
        %v737 = vpop.f32.mrb[0].mxu0
        %v738 = vadd.f32 %v614, %v737
        %v739 = vpop.f32.mrb[0].mxu0
        %740 = vmatprep.mubr.f32.mxu0 0.0
        %741 = vmatmul.mubr.f32.gmra.mrb[0].mxu0 %v639
        %v742 = vpop.f32.mrb[0].mxu0
        %v743 = vadd.f32 %v615, %v742
        %v744 = vpop.f32.mrb[0].mxu0
        %745 = vdwg.mxu0
        %746 = vst [vmem:[%s163] sm:$0xff] %v708
        %747 = vst [vmem:[%s163 + $0x8] sm:$0xff] %v713
        %748 = vst [vmem:[%s163 + $0x10] sm:$0xff] %v718
        %749 = vst [vmem:[%s163 + $0x18] sm:$0xff] %v723
        %750 = vst [vmem:[%s163 + $0x20] sm:$0xff] %v728
        %751 = vst [vmem:[%s163 + $0x28] sm:$0xff] %v733
        %752 = vst [vmem:[%s163 + $0x30] sm:$0xff] %v738
        %753 = vst [vmem:[%s163 + $0x38] sm:$0xff] %v743
        %s754 = sand.u32 %s93, 1
        %s755 = scalar_lea.sflag [#allocation4], %s754
        %s756 = sand.u32 %s93, 1
        %s757 = smul.addr %s756, 64
        %s758 = scalar_lea.vmem [#allocation3], %s757
        // Predicated region
        $region33: #{tpu_custom_call.1} parent=31 // pred_check
          %p759 = pneg %p103
        $region34: #{tpu_custom_call.1} parent=31 // pred_check_branch
          %761 = sbr.rel (%p759) target = $region36
        $region35: #{tpu_custom_call.1} parent=31 // pred_region
          %s763 = ssub.s32 1024, 1024
          %764 = vsyncadd %s755, %s763
          %s765 = smul.addr %s17, 8
          %s766 = smul.addr %s765, 128
          %s767 = scalar_lea.hbm %s3, %s766
          %s768 = sshll.u32 %s758, 4
          %s769 = int_to_ptr.vmem [resolvable:$true] %s768
          %774 = dma.vmem_to_hbm [thread:$0]  %s769, 1024, %s767, %s755, 128, 128, 8
        $region36: #{tpu_custom_call.1} parent=31 // pred_fallthru
          _
      $region32: #{tpu_custom_call.1} parent=5 // pred_fallthru
        _
      %p775 = scmp.le.s32.totalorder 2, %s12
      // Predicated region
      $region37: #{tpu_custom_call.1} parent=5 // pred_check
        %p776 = pneg %p775
      $region38: #{tpu_custom_call.1} parent=5 // pred_check_branch
        %778 = sbr.rel (%p776) target = $region40
      $region39: #{tpu_custom_call.1} parent=5 // pred_region
        %s779 = ssub.s32 %s12, 2
        // Predicated region
        $region41: #{tpu_custom_call.1} parent=39 // pred_check
          %p780 = pneg %p109
        $region42: #{tpu_custom_call.1} parent=39 // pred_check_branch
          %782 = sbr.rel (%p780) target = $region44
        $region43: #{tpu_custom_call.1} parent=39 // pred_region
          %s783 = sand.u32 %s94, 1
          %s784 = scalar_lea.sflag [#allocation4], %s783
          %s785 = sand.u32 %s94, 1
          %s786 = smul.addr %s785, 64
          %s787 = scalar_lea.vmem [#allocation3], %s786
          %788 = dma.done %s784, 1024
        $region44: #{tpu_custom_call.1} parent=39 // pred_fallthru
          _
      $region40: #{tpu_custom_call.1} parent=5 // pred_fallthru
        _
    $region6: #{tpu_custom_call.1} parent=1 // loop_footer
      %s16 = sadd.s32 1, %s12
    $region7: #{tpu_custom_call.1} parent=1 // loop_footer_branch
      %11 = sbr.rel target = $region3
    $region8: #{tpu_custom_call.1} parent=1 // loop_exit
      _
    %789 = vsyncpa [#allocation4], 1
    %s790 = scalar_lea.sflag [#allocation4], 1
    %791 = vsyncpa %s790, 1

</llo_original>
